<compile_context>
chip_gen: v5e
topology: v5e:2x2
jax: 0.10.0
libtpu: 0.0.40
codegen_flags: <defaults>
</compile_context>

<pallas_src>
import functools

import numpy as np

import jax
import jax.numpy as jnp
from jax.experimental import pallas as pl
from jax.experimental.pallas import tpu as pltpu  # noqa: F401  (TPU backend)


# ----------------------------------------------------------------------------
# Pallas kernels
# ----------------------------------------------------------------------------
def _convT_bn_lrelu_kernel(wt_ref, pt_ref, g_ref, b_ref, o_ref):
    """Conv layer as a transposed GEMM with fused BatchNorm + LeakyReLU(0.2).

    wt_ref: [Cout, K]  bf16   conv weight  (K = kh*kw*Cin)
    pt_ref: [K, M]     bf16   im2col patches, transposed (M = N*Ho*Wo)
    g_ref, b_ref: [Cout, 1] f32
    o_ref:  [Cout, M]  f32    lane-dense output (M on the 128-lane axis)
    """
    y = jnp.dot(wt_ref[...], pt_ref[...], preferred_element_type=jnp.float32)
    # Training-mode BatchNorm: per-channel (= per-row) stats over batch*spatial.
    mean = jnp.mean(y, axis=1, keepdims=True)
    d = y - mean
    var = jnp.mean(d * d, axis=1, keepdims=True)          # biased variance
    scale = g_ref[...] * jax.lax.rsqrt(var + 1e-5)
    z = d * scale + b_ref[...]
    o_ref[...] = jnp.where(z >= 0, z, 0.2 * z)            # LeakyReLU(0.2)


def _tail_kernel(x_ref,
                 w3_ref, f3_ref, ft3_ref, g3_ref, b3_ref,
                 w4_ref, f4_ref, ft4_ref, g4_ref, b4_ref,
                 wh_ref, bh_ref, o_ref):
    """Layers 3, 4, 5 and the FC head fused into a single kernel.

    Activations stay per-sample flattened [N, H*W*C] (lane-dense).  Each conv
    is one GEMM against a pre-scattered weight that embeds padding/stride.
    BatchNorm channel statistics are folded / broadcast with the 0/1 matrices
    f ([S*C, C], columns -> channels) and ft ([C, S*C], channels -> columns).
    conv5 and fc are pre-folded into wh ([K, 1]); sigmoid finishes it.
    """
    def conv_bn_lrelu(x_bf16, w_ref, f_ref, ft_ref, g_ref, b_ref):
        y = jnp.dot(x_bf16, w_ref[...], preferred_element_type=jnp.float32)
        n = y.shape[0]
        c = f_ref.shape[1]
        cnt = float(n * (y.shape[1] // c))                 # N * Hout * Wout
        colsum = jnp.sum(y, axis=0, keepdims=True)         # [1, S*C]
        mean = jnp.dot(colsum, f_ref[...],
                       preferred_element_type=jnp.float32) / cnt   # [1, C]
        d = y - jnp.dot(mean, ft_ref[...], preferred_element_type=jnp.float32)
        var = jnp.dot(jnp.sum(d * d, axis=0, keepdims=True), f_ref[...],
                      preferred_element_type=jnp.float32) / cnt     # [1, C]
        scale = g_ref[...] * jax.lax.rsqrt(var + 1e-5)               # [1, C]
        z = (d * jnp.dot(scale, ft_ref[...], preferred_element_type=jnp.float32)
             + jnp.dot(b_ref[...], ft_ref[...], preferred_element_type=jnp.float32))
        return jnp.where(z >= 0, z, 0.2 * z)               # LeakyReLU(0.2)

    x3 = conv_bn_lrelu(x_ref[...], w3_ref, f3_ref, ft3_ref, g3_ref, b3_ref)
    x4 = conv_bn_lrelu(x3.astype(jnp.bfloat16),
                       w4_ref, f4_ref, ft4_ref, g4_ref, b4_ref)
    # conv5 + fc folded into one weight; then sigmoid.
    logits = jnp.dot(x4, wh_ref[...], preferred_element_type=jnp.float32) + bh_ref[...]
    o_ref[...] = jax.nn.sigmoid(logits)


# ----------------------------------------------------------------------------
# pallas_call wrappers (single grid step; everything fits VMEM at these sizes)
# ----------------------------------------------------------------------------
def conv_bn_lrelu_T(wt, pt, gamma, beta):
    cout, k = wt.shape
    m = pt.shape[1]
    return pl.pallas_call(
        _convT_bn_lrelu_kernel,
        out_shape=jax.ShapeDtypeStruct((cout, m), jnp.float32),
        grid=(1,),
        in_specs=[
            pl.BlockSpec((cout, k), lambda i: (0, 0)),
            pl.BlockSpec((k, m), lambda i: (0, 0)),
            pl.BlockSpec((cout, 1), lambda i: (0, 0)),
            pl.BlockSpec((cout, 1), lambda i: (0, 0)),
        ],
        out_specs=pl.BlockSpec((cout, m), lambda i: (0, 0)),
    )(wt, pt, gamma, beta)


def tail(*args):
    n = args[0].shape[0]
    return pl.pallas_call(
        _tail_kernel,
        out_shape=jax.ShapeDtypeStruct((n, 1), jnp.float32),
        grid=(1,),
        in_specs=[pl.BlockSpec(a.shape, lambda i: (0, 0)) for a in args],
        out_specs=pl.BlockSpec((n, 1), lambda i: (0, 0)),
    )(*args)


# ----------------------------------------------------------------------------
# Wrapper glue: im2col / weight re-layout (plain JAX / numpy constants)
# ----------------------------------------------------------------------------
def im2col_T(x_nhwc, k=4, s=2, p=1):
    """[N,H,W,C] -> transposed patches [k*k*C, N*Ho*Wo]; K ordered (kh,kw,c)."""
    N, H, W, C = x_nhwc.shape
    xp = jnp.pad(x_nhwc, ((0, 0), (p, p), (p, p), (0, 0)))
    Ho = (H + 2 * p - k) // s + 1
    Wo = (W + 2 * p - k) // s + 1
    cols = [xp[:, di:di + Ho * s:s, dj:dj + Wo * s:s, :]
            for di in range(k) for dj in range(k)]          # each [N,Ho,Wo,C]
    patches = jnp.concatenate(cols, axis=-1)                # [N,Ho,Wo,k*k*C]
    return patches.reshape(N * Ho * Wo, k * k * C).T, (N, Ho, Wo)


def conv_weight_T(w_oihw):
    """PyTorch [Cout,Cin,kh,kw] -> [Cout, kh*kw*Cin] matching im2col_T ordering."""
    cout, cin, kh, kw = w_oihw.shape
    return jnp.transpose(w_oihw, (0, 2, 3, 1)).reshape(cout, kh * kw * cin)


def conv_weight_flat(w_oihw, hi, wi, s=2, p=1):
    """[Cout,Cin,kh,kw] -> [hi*wi*Cin, ho*wo*Cout].

    Embeds stride-2 / pad-1 geometry so the whole conv is a single GEMM on
    per-sample flattened NHWC activations; padded taps simply get zero rows.
    """
    cout, cin, kh, kw = w_oihw.shape
    ho = (hi + 2 * p - kh) // s + 1
    wo = (wi + 2 * p - kw) // s + 1
    tap = np.zeros((hi * wi, kh * kw, ho * wo), np.float32)
    for oy in range(ho):
        for ox in range(wo):
            for ky in range(kh):
                for kx in range(kw):
                    iy, ix = oy * s - p + ky, ox * s - p + kx
                    if 0 <= iy < hi and 0 <= ix < wi:
                        tap[iy * wi + ix, ky * kw + kx, oy * wo + ox] = 1.0
    w_t = jnp.transpose(w_oihw, (2, 3, 1, 0)).reshape(kh * kw, cin, cout)
    big = jnp.einsum("ito,tcd->icod", jnp.asarray(tap), w_t)
    return big.reshape(hi * wi * cin, ho * wo * cout)


def bn_fold_mats(spatial, c):
    """f: [S*C, C] folds columns to channels; ft = f.T broadcasts back."""
    f = np.tile(np.eye(c, dtype=np.float32), (spatial, 1))
    return jnp.asarray(f), jnp.asarray(f.T)


# ----------------------------------------------------------------------------
# Discriminator forward
# ----------------------------------------------------------------------------
def discriminator_forward(x_nchw, params):
    cd = params["conv1_w"].shape[0]                       # conv_dim
    N = x_nchw.shape[0]
    x = jnp.transpose(x_nchw, (0, 2, 3, 1)).astype(jnp.float32)   # NHWC

    # ---- layer 1 (Cin padded 3 -> 4 so K = 64 is tile friendly) ----
    x = jnp.pad(x, ((0, 0), (0, 0), (0, 0), (0, 1)))
    w1 = jnp.pad(params["conv1_w"], ((0, 0), (0, 1), (0, 0), (0, 0)))
    pt1, (_, H1, W1) = im2col_T(x)
    y1 = conv_bn_lrelu_T(conv_weight_T(w1).astype(jnp.bfloat16),
                         pt1.astype(jnp.bfloat16),
                         params["bn1_gamma"].reshape(cd, 1),
                         params["bn1_beta"].reshape(cd, 1))        # [cd, N*16*16]
    x1 = y1.T.reshape(N, H1, W1, cd)

    # ---- layer 2 ----
    pt2, (_, H2, W2) = im2col_T(x1)
    y2 = conv_bn_lrelu_T(conv_weight_T(params["conv2_w"]).astype(jnp.bfloat16),
                         pt2.astype(jnp.bfloat16),
                         params["bn2_gamma"].reshape(2 * cd, 1),
                         params["bn2_beta"].reshape(2 * cd, 1))    # [2cd, N*8*8]
    x2 = y2.T.reshape(N, H2 * W2 * 2 * cd)                         # [N, 8*8*2cd]

    # ---- layers 3, 4, 5 + fc + sigmoid: one fused kernel ----
    w3 = conv_weight_flat(params["conv3_w"], H2, W2).astype(jnp.bfloat16)
    w4 = conv_weight_flat(params["conv4_w"], H2 // 2, W2 // 2).astype(jnp.bfloat16)
    w5 = conv_weight_flat(params["conv5_w"], H2 // 4, W2 // 4)     # [2*2*8cd, 16cd]
    w_head = jnp.dot(w5, params["fc_w"])                           # conv5 ∘ fc
    f3, ft3 = bn_fold_mats((H2 // 2) * (W2 // 2), 4 * cd)
    f4, ft4 = bn_fold_mats((H2 // 4) * (W2 // 4), 8 * cd)
    return tail(x2.astype(jnp.bfloat16),
                w3, f3, ft3,
                params["bn3_gamma"].reshape(1, 4 * cd),
                params["bn3_beta"].reshape(1, 4 * cd),
                w4, f4, ft4,
                params["bn4_gamma"].reshape(1, 8 * cd),
                params["bn4_beta"].reshape(1, 8 * cd),
                w_head, params["fc_b"])


def init_params(conv_dim, key):
    ks = jax.random.split(key, 16)
    cins = [3, conv_dim, conv_dim * 2, conv_dim * 4, conv_dim * 8]
    couts = [conv_dim, conv_dim * 2, conv_dim * 4, conv_dim * 8, conv_dim * 16]
    params = {}
    ki = 0
    for li in range(1, 6):
        params[f"conv{li}_w"] = 0.05 * jax.random.normal(
            ks[ki], (couts[li - 1], cins[li - 1], 4, 4), jnp.float32)
        ki += 1
    for li in range(1, 5):
        c = couts[li - 1]
        params[f"bn{li}_gamma"] = 1.0 + 0.1 * jax.random.normal(ks[ki], (c,), jnp.float32)
        ki += 1
        params[f"bn{li}_beta"] = 0.1 * jax.random.normal(ks[ki], (c,), jnp.float32)
        ki += 1
    feat = conv_dim * 4 * 4                     # fc input size (== conv_dim*16)
    params["fc_w"] = 0.05 * jax.random.normal(ks[ki], (feat, 1), jnp.float32)
    ki += 1
    params["fc_b"] = 0.05 * jax.random.normal(ks[ki], (1, 1), jnp.float32)
    return params


if __name__ == "__main__":
    conv_dim = 4
    batch = 2
    key = jax.random.PRNGKey(0)
    kx, kp = jax.random.split(key)

    # Architecture requires 32x32 input so x.view(-1, conv_dim*4*4) keeps the batch.
    x = jax.random.normal(kx, (batch, 3, 32, 32), jnp.float32)   # NCHW, like PyTorch
    params = init_params(conv_dim, kp)

    out = jax.block_until_ready(
        jax.jit(functools.partial(discriminator_forward, params=params))(x)
    )
    assert out.shape == (batch, 1)
    assert bool(jnp.all(jnp.isfinite(out)))
    assert bool(jnp.all((out > 0.0) & (out < 1.0)))
    print("KERNEL_OK")
</pallas_src>

<mosaic_0001>
module attributes {stable_mosaic.version = 11 : i64} {
  func.func @_convT_bn_lrelu_kernel(%arg0: i32, %arg1: memref<4x64xbf16, #tpu.memory_space<vmem>>, %arg2: memref<64x512xbf16, #tpu.memory_space<vmem>>, %arg3: memref<4x1xf32, #tpu.memory_space<vmem>>, %arg4: memref<4x1xf32, #tpu.memory_space<vmem>>, %arg5: memref<4x512xf32, #tpu.memory_space<vmem>>) attributes {dimension_semantics = [#tpu.dimension_semantics<arbitrary>], iteration_bounds = array<i64: 1>, scalar_prefetch = 0 : i64, scratch_operands = 0 : i64, tpu.core_type = #tpu.core_type<tc>, window_params = [{pipeline_mode = #tpu.pipeline_mode<synchronous>, transform_indices = @transform_0, window_bounds = array<i64: 4, 64>}, {pipeline_mode = #tpu.pipeline_mode<synchronous>, transform_indices = @transform_1, window_bounds = array<i64: 64, 512>}, {pipeline_mode = #tpu.pipeline_mode<synchronous>, transform_indices = @transform_2, window_bounds = array<i64: 4, 1>}, {pipeline_mode = #tpu.pipeline_mode<synchronous>, transform_indices = @transform_3, window_bounds = array<i64: 4, 1>}, {pipeline_mode = #tpu.pipeline_mode<synchronous>, transform_indices = @transform_4, window_bounds = array<i64: 4, 512>}]} {
    %c0 = arith.constant 0 : index
    %c0_0 = arith.constant 0 : index
    %0 = vector.load %arg1[%c0, %c0_0] : memref<4x64xbf16, #tpu.memory_space<vmem>>, vector<4x64xbf16>
    %c0_1 = arith.constant 0 : index
    %c0_2 = arith.constant 0 : index
    %1 = vector.load %arg2[%c0_1, %c0_2] : memref<64x512xbf16, #tpu.memory_space<vmem>>, vector<64x512xbf16>
    %cst = arith.constant dense<0.000000e+00> : vector<4x512xf32>
    %2 = tpu.matmul %0, %1, %cst {dimension_numbers = #tpu.dot_dimension_numbers<[1], [0], [0], [1], [0, 0, 1, 1], [], []>} : vector<4x64xbf16>, vector<64x512xbf16>, vector<4x512xf32> -> vector<4x512xf32>
    %cst_3 = arith.constant dense<0.000000e+00> : vector<4xf32>
    %3 = vector.multi_reduction <add>, %2, %cst_3 [1] : vector<4x512xf32> to vector<4xf32>
    %4 = vector.shape_cast %3 : vector<4xf32> to vector<4x1xf32>
    %cst_4 = arith.constant 5.120000e+02 : f32
    %5 = vector.broadcast %cst_4 : f32 to vector<4x1xf32>
    %6 = arith.divf %4, %5 : vector<4x1xf32>
    %7 = vector.broadcast %6 : vector<4x1xf32> to vector<4x512xf32>
    %8 = arith.subf %2, %7 : vector<4x512xf32>
    %9 = arith.mulf %8, %8 : vector<4x512xf32>
    %cst_5 = arith.constant dense<0.000000e+00> : vector<4xf32>
    %10 = vector.multi_reduction <add>, %9, %cst_5 [1] : vector<4x512xf32> to vector<4xf32>
    %11 = vector.shape_cast %10 : vector<4xf32> to vector<4x1xf32>
    %cst_6 = arith.constant 5.120000e+02 : f32
    %12 = vector.broadcast %cst_6 : f32 to vector<4x1xf32>
    %13 = arith.divf %11, %12 : vector<4x1xf32>
    %c0_7 = arith.constant 0 : index
    %c0_8 = arith.constant 0 : index
    %14 = vector.load %arg3[%c0_7, %c0_8] : memref<4x1xf32, #tpu.memory_space<vmem>>, vector<4x1xf32>
    %cst_9 = arith.constant 9.99999974E-6 : f32
    %15 = vector.broadcast %cst_9 : f32 to vector<4x1xf32>
    %16 = arith.addf %13, %15 : vector<4x1xf32>
    %17 = math.rsqrt %16 : vector<4x1xf32>
    %18 = arith.mulf %14, %17 : vector<4x1xf32>
    %19 = vector.broadcast %18 : vector<4x1xf32> to vector<4x512xf32>
    %20 = arith.mulf %8, %19 : vector<4x512xf32>
    %c0_10 = arith.constant 0 : index
    %c0_11 = arith.constant 0 : index
    %21 = vector.load %arg4[%c0_10, %c0_11] : memref<4x1xf32, #tpu.memory_space<vmem>>, vector<4x1xf32>
    %22 = vector.broadcast %21 : vector<4x1xf32> to vector<4x512xf32>
    %23 = arith.addf %20, %22 : vector<4x512xf32>
    %cst_12 = arith.constant 0.000000e+00 : f32
    %24 = vector.broadcast %cst_12 : f32 to vector<4x512xf32>
    %25 = arith.cmpf oge, %23, %24 : vector<4x512xf32>
    %cst_13 = arith.constant 2.000000e-01 : f32
    %26 = vector.broadcast %cst_13 : f32 to vector<4x512xf32>
    %27 = arith.mulf %26, %23 : vector<4x512xf32>
    %28 = arith.select %25, %23, %27 : vector<4x512xi1>, vector<4x512xf32>
    %c0_14 = arith.constant 0 : index
    %c0_15 = arith.constant 0 : index
    %29 = vector.load %arg5[%c0_14, %c0_15] : memref<4x512xf32, #tpu.memory_space<vmem>>, vector<4x512xf32>
    tpu.vector_store %arg5[%c0_14, %c0_15], %28 {strides = array<i32>} : memref<4x512xf32, #tpu.memory_space<vmem>>, vector<4x512xf32>,
    return
  }
  func.func @transform_0(%arg0: i32) -> (i32, i32) {
    %c0_i32 = arith.constant 0 : i32
    %c0_i32_0 = arith.constant 0 : i32
    %c0_i32_1 = arith.constant 0 : i32
    return %c0_i32, %c0_i32_0 : i32, i32
  }
  func.func @transform_1(%arg0: i32) -> (i32, i32) {
    %c0_i32 = arith.constant 0 : i32
    %c0_i32_0 = arith.constant 0 : i32
    %c0_i32_1 = arith.constant 0 : i32
    return %c0_i32, %c0_i32_0 : i32, i32
  }
  func.func @transform_2(%arg0: i32) -> (i32, i32) {
    %c0_i32 = arith.constant 0 : i32
    %c0_i32_0 = arith.constant 0 : i32
    %c0_i32_1 = arith.constant 0 : i32
    return %c0_i32, %c0_i32_0 : i32, i32
  }
  func.func @transform_3(%arg0: i32) -> (i32, i32) {
    %c0_i32 = arith.constant 0 : i32
    %c0_i32_0 = arith.constant 0 : i32
    %c0_i32_1 = arith.constant 0 : i32
    return %c0_i32, %c0_i32_0 : i32, i32
  }
  func.func @transform_4(%arg0: i32) -> (i32, i32) {
    %c0_i32 = arith.constant 0 : i32
    %c0_i32_0 = arith.constant 0 : i32
    %c0_i32_1 = arith.constant 0 : i32
    return %c0_i32, %c0_i32_0 : i32, i32
  }
}

module attributes {stable_mosaic.version = 11 : i64} {
  func.func @_convT_bn_lrelu_kernel(%arg0: i32, %arg1: memref<8x64xbf16, #tpu.memory_space<vmem>>, %arg2: memref<64x128xbf16, #tpu.memory_space<vmem>>, %arg3: memref<8x1xf32, #tpu.memory_space<vmem>>, %arg4: memref<8x1xf32, #tpu.memory_space<vmem>>, %arg5: memref<8x128xf32, #tpu.memory_space<vmem>>) attributes {dimension_semantics = [#tpu.dimension_semantics<arbitrary>], iteration_bounds = array<i64: 1>, scalar_prefetch = 0 : i64, scratch_operands = 0 : i64, tpu.core_type = #tpu.core_type<tc>, window_params = [{pipeline_mode = #tpu.pipeline_mode<synchronous>, transform_indices = @transform_0, window_bounds = array<i64: 8, 64>}, {pipeline_mode = #tpu.pipeline_mode<synchronous>, transform_indices = @transform_1, window_bounds = array<i64: 64, 128>}, {pipeline_mode = #tpu.pipeline_mode<synchronous>, transform_indices = @transform_2, window_bounds = array<i64: 8, 1>}, {pipeline_mode = #tpu.pipeline_mode<synchronous>, transform_indices = @transform_3, window_bounds = array<i64: 8, 1>}, {pipeline_mode = #tpu.pipeline_mode<synchronous>, transform_indices = @transform_4, window_bounds = array<i64: 8, 128>}]} {
    %c0 = arith.constant 0 : index
    %c0_0 = arith.constant 0 : index
    %0 = vector.load %arg1[%c0, %c0_0] : memref<8x64xbf16, #tpu.memory_space<vmem>>, vector<8x64xbf16>
    %c0_1 = arith.constant 0 : index
    %c0_2 = arith.constant 0 : index
    %1 = vector.load %arg2[%c0_1, %c0_2] : memref<64x128xbf16, #tpu.memory_space<vmem>>, vector<64x128xbf16>
    %cst = arith.constant dense<0.000000e+00> : vector<8x128xf32>
    %2 = tpu.matmul %0, %1, %cst {dimension_numbers = #tpu.dot_dimension_numbers<[1], [0], [0], [1], [0, 0, 1, 1], [], []>} : vector<8x64xbf16>, vector<64x128xbf16>, vector<8x128xf32> -> vector<8x128xf32>
    %cst_3 = arith.constant dense<0.000000e+00> : vector<8xf32>
    %3 = vector.multi_reduction <add>, %2, %cst_3 [1] : vector<8x128xf32> to vector<8xf32>
    %4 = vector.shape_cast %3 : vector<8xf32> to vector<8x1xf32>
    %cst_4 = arith.constant 1.280000e+02 : f32
    %5 = vector.broadcast %cst_4 : f32 to vector<8x1xf32>
    %6 = arith.divf %4, %5 : vector<8x1xf32>
    %7 = vector.broadcast %6 : vector<8x1xf32> to vector<8x128xf32>
    %8 = arith.subf %2, %7 : vector<8x128xf32>
    %9 = arith.mulf %8, %8 : vector<8x128xf32>
    %cst_5 = arith.constant dense<0.000000e+00> : vector<8xf32>
    %10 = vector.multi_reduction <add>, %9, %cst_5 [1] : vector<8x128xf32> to vector<8xf32>
    %11 = vector.shape_cast %10 : vector<8xf32> to vector<8x1xf32>
    %cst_6 = arith.constant 1.280000e+02 : f32
    %12 = vector.broadcast %cst_6 : f32 to vector<8x1xf32>
    %13 = arith.divf %11, %12 : vector<8x1xf32>
    %c0_7 = arith.constant 0 : index
    %c0_8 = arith.constant 0 : index
    %14 = vector.load %arg3[%c0_7, %c0_8] : memref<8x1xf32, #tpu.memory_space<vmem>>, vector<8x1xf32>
    %cst_9 = arith.constant 9.99999974E-6 : f32
    %15 = vector.broadcast %cst_9 : f32 to vector<8x1xf32>
    %16 = arith.addf %13, %15 : vector<8x1xf32>
    %17 = math.rsqrt %16 : vector<8x1xf32>
    %18 = arith.mulf %14, %17 : vector<8x1xf32>
    %19 = vector.broadcast %18 : vector<8x1xf32> to vector<8x128xf32>
    %20 = arith.mulf %8, %19 : vector<8x128xf32>
    %c0_10 = arith.constant 0 : index
    %c0_11 = arith.constant 0 : index
    %21 = vector.load %arg4[%c0_10, %c0_11] : memref<8x1xf32, #tpu.memory_space<vmem>>, vector<8x1xf32>
    %22 = vector.broadcast %21 : vector<8x1xf32> to vector<8x128xf32>
    %23 = arith.addf %20, %22 : vector<8x128xf32>
    %cst_12 = arith.constant 0.000000e+00 : f32
    %24 = vector.broadcast %cst_12 : f32 to vector<8x128xf32>
    %25 = arith.cmpf oge, %23, %24 : vector<8x128xf32>
    %cst_13 = arith.constant 2.000000e-01 : f32
    %26 = vector.broadcast %cst_13 : f32 to vector<8x128xf32>
    %27 = arith.mulf %26, %23 : vector<8x128xf32>
    %28 = arith.select %25, %23, %27 : vector<8x128xi1>, vector<8x128xf32>
    %c0_14 = arith.constant 0 : index
    %c0_15 = arith.constant 0 : index
    %29 = vector.load %arg5[%c0_14, %c0_15] : memref<8x128xf32, #tpu.memory_space<vmem>>, vector<8x128xf32>
    tpu.vector_store %arg5[%c0_14, %c0_15], %28 {strides = array<i32>} : memref<8x128xf32, #tpu.memory_space<vmem>>, vector<8x128xf32>,
    return
  }
  func.func @transform_0(%arg0: i32) -> (i32, i32) {
    %c0_i32 = arith.constant 0 : i32
    %c0_i32_0 = arith.constant 0 : i32
    %c0_i32_1 = arith.constant 0 : i32
    return %c0_i32, %c0_i32_0 : i32, i32
  }
  func.func @transform_1(%arg0: i32) -> (i32, i32) {
    %c0_i32 = arith.constant 0 : i32
    %c0_i32_0 = arith.constant 0 : i32
    %c0_i32_1 = arith.constant 0 : i32
    return %c0_i32, %c0_i32_0 : i32, i32
  }
  func.func @transform_2(%arg0: i32) -> (i32, i32) {
    %c0_i32 = arith.constant 0 : i32
    %c0_i32_0 = arith.constant 0 : i32
    %c0_i32_1 = arith.constant 0 : i32
    return %c0_i32, %c0_i32_0 : i32, i32
  }
  func.func @transform_3(%arg0: i32) -> (i32, i32) {
    %c0_i32 = arith.constant 0 : i32
    %c0_i32_0 = arith.constant 0 : i32
    %c0_i32_1 = arith.constant 0 : i32
    return %c0_i32, %c0_i32_0 : i32, i32
  }
  func.func @transform_4(%arg0: i32) -> (i32, i32) {
    %c0_i32 = arith.constant 0 : i32
    %c0_i32_0 = arith.constant 0 : i32
    %c0_i32_1 = arith.constant 0 : i32
    return %c0_i32, %c0_i32_0 : i32, i32
  }
}

module attributes {stable_mosaic.version = 11 : i64} {
  func.func @_tail_kernel(%arg0: i32, %arg1: memref<2x512xbf16, #tpu.memory_space<vmem>>, %arg2: memref<512x256xbf16, #tpu.memory_space<vmem>>, %arg3: memref<256x16xf32, #tpu.memory_space<vmem>>, %arg4: memref<16x256xf32, #tpu.memory_space<vmem>>, %arg5: memref<1x16xf32, #tpu.memory_space<vmem>>, %arg6: memref<1x16xf32, #tpu.memory_space<vmem>>, %arg7: memref<256x128xbf16, #tpu.memory_space<vmem>>, %arg8: memref<128x32xf32, #tpu.memory_space<vmem>>, %arg9: memref<32x128xf32, #tpu.memory_space<vmem>>, %arg10: memref<1x32xf32, #tpu.memory_space<vmem>>, %arg11: memref<1x32xf32, #tpu.memory_space<vmem>>, %arg12: memref<128x1xf32, #tpu.memory_space<vmem>>, %arg13: memref<1x1xf32, #tpu.memory_space<vmem>>, %arg14: memref<2x1xf32, #tpu.memory_space<vmem>>) attributes {dimension_semantics = [#tpu.dimension_semantics<arbitrary>], iteration_bounds = array<i64: 1>, scalar_prefetch = 0 : i64, scratch_operands = 0 : i64, tpu.core_type = #tpu.core_type<tc>, window_params = [{pipeline_mode = #tpu.pipeline_mode<synchronous>, transform_indices = @transform_0, window_bounds = array<i64: 2, 512>}, {pipeline_mode = #tpu.pipeline_mode<synchronous>, transform_indices = @transform_1, window_bounds = array<i64: 512, 256>}, {pipeline_mode = #tpu.pipeline_mode<synchronous>, transform_indices = @transform_2, window_bounds = array<i64: 256, 16>}, {pipeline_mode = #tpu.pipeline_mode<synchronous>, transform_indices = @transform_3, window_bounds = array<i64: 16, 256>}, {pipeline_mode = #tpu.pipeline_mode<synchronous>, transform_indices = @transform_4, window_bounds = array<i64: 1, 16>}, {pipeline_mode = #tpu.pipeline_mode<synchronous>, transform_indices = @transform_5, window_bounds = array<i64: 1, 16>}, {pipeline_mode = #tpu.pipeline_mode<synchronous>, transform_indices = @transform_6, window_bounds = array<i64: 256, 128>}, {pipeline_mode = #tpu.pipeline_mode<synchronous>, transform_indices = @transform_7, window_bounds = array<i64: 128, 32>}, {pipeline_mode = #tpu.pipeline_mode<synchronous>, transform_indices = @transform_8, window_bounds = array<i64: 32, 128>}, {pipeline_mode = #tpu.pipeline_mode<synchronous>, transform_indices = @transform_9, window_bounds = array<i64: 1, 32>}, {pipeline_mode = #tpu.pipeline_mode<synchronous>, transform_indices = @transform_10, window_bounds = array<i64: 1, 32>}, {pipeline_mode = #tpu.pipeline_mode<synchronous>, transform_indices = @transform_11, window_bounds = array<i64: 128, 1>}, {pipeline_mode = #tpu.pipeline_mode<synchronous>, transform_indices = @transform_12, window_bounds = array<i64: 1, 1>}, {pipeline_mode = #tpu.pipeline_mode<synchronous>, transform_indices = @transform_13, window_bounds = array<i64: 2, 1>}]} {
    %c0 = arith.constant 0 : index
    %c0_0 = arith.constant 0 : index
    %0 = vector.load %arg1[%c0, %c0_0] : memref<2x512xbf16, #tpu.memory_space<vmem>>, vector<2x512xbf16>
    %c0_1 = arith.constant 0 : index
    %c0_2 = arith.constant 0 : index
    %1 = vector.load %arg2[%c0_1, %c0_2] : memref<512x256xbf16, #tpu.memory_space<vmem>>, vector<512x256xbf16>
    %cst = arith.constant dense<0.000000e+00> : vector<2x256xf32>
    %2 = tpu.matmul %0, %1, %cst {dimension_numbers = #tpu.dot_dimension_numbers<[1], [0], [0], [1], [0, 0, 1, 1], [], []>} : vector<2x512xbf16>, vector<512x256xbf16>, vector<2x256xf32> -> vector<2x256xf32>
    %cst_3 = arith.constant dense<0.000000e+00> : vector<256xf32>
    %3 = vector.multi_reduction <add>, %2, %cst_3 [0] : vector<2x256xf32> to vector<256xf32>
    %4 = vector.shape_cast %3 : vector<256xf32> to vector<1x256xf32>
    %c0_4 = arith.constant 0 : index
    %c0_5 = arith.constant 0 : index
    %5 = vector.load %arg3[%c0_4, %c0_5] : memref<256x16xf32, #tpu.memory_space<vmem>>, vector<256x16xf32>
    %cst_6 = arith.constant dense<0.000000e+00> : vector<1x16xf32>
    %6 = tpu.matmul %4, %5, %cst_6 {dimension_numbers = #tpu.dot_dimension_numbers<[1], [0], [0], [1], [0, 0, 1, 1], [], []>} : vector<1x256xf32>, vector<256x16xf32>, vector<1x16xf32> -> vector<1x16xf32>
    %cst_7 = arith.constant 3.200000e+01 : f32
    %7 = vector.broadcast %cst_7 : f32 to vector<1x16xf32>
    %8 = arith.divf %6, %7 : vector<1x16xf32>
    %c0_8 = arith.constant 0 : index
    %c0_9 = arith.constant 0 : index
    %9 = vector.load %arg4[%c0_8, %c0_9] : memref<16x256xf32, #tpu.memory_space<vmem>>, vector<16x256xf32>
    %cst_10 = arith.constant dense<0.000000e+00> : vector<1x256xf32>
    %10 = tpu.matmul %8, %9, %cst_10 {dimension_numbers = #tpu.dot_dimension_numbers<[1], [0], [0], [1], [0, 0, 1, 1], [], []>} : vector<1x16xf32>, vector<16x256xf32>, vector<1x256xf32> -> vector<1x256xf32>
    %11 = vector.broadcast %10 : vector<1x256xf32> to vector<2x256xf32>
    %12 = arith.subf %2, %11 : vector<2x256xf32>
    %13 = arith.mulf %12, %12 : vector<2x256xf32>
    %cst_11 = arith.constant dense<0.000000e+00> : vector<256xf32>
    %14 = vector.multi_reduction <add>, %13, %cst_11 [0] : vector<2x256xf32> to vector<256xf32>
    %15 = vector.shape_cast %14 : vector<256xf32> to vector<1x256xf32>
    %c0_12 = arith.constant 0 : index
    %c0_13 = arith.constant 0 : index
    %16 = vector.load %arg3[%c0_12, %c0_13] : memref<256x16xf32, #tpu.memory_space<vmem>>, vector<256x16xf32>
    %cst_14 = arith.constant dense<0.000000e+00> : vector<1x16xf32>
    %17 = tpu.matmul %15, %16, %cst_14 {dimension_numbers = #tpu.dot_dimension_numbers<[1], [0], [0], [1], [0, 0, 1, 1], [], []>} : vector<1x256xf32>, vector<256x16xf32>, vector<1x16xf32> -> vector<1x16xf32>
    %cst_15 = arith.constant 3.200000e+01 : f32
    %18 = vector.broadcast %cst_15 : f32 to vector<1x16xf32>
    %19 = arith.divf %17, %18 : vector<1x16xf32>
    %c0_16 = arith.constant 0 : index
    %c0_17 = arith.constant 0 : index
    %20 = vector.load %arg5[%c0_16, %c0_17] : memref<1x16xf32, #tpu.memory_space<vmem>>, vector<1x16xf32>
    %cst_18 = arith.constant 9.99999974E-6 : f32
    %21 = vector.broadcast %cst_18 : f32 to vector<1x16xf32>
    %22 = arith.addf %19, %21 : vector<1x16xf32>
    %23 = math.rsqrt %22 : vector<1x16xf32>
    %24 = arith.mulf %20, %23 : vector<1x16xf32>
    %c0_19 = arith.constant 0 : index
    %c0_20 = arith.constant 0 : index
    %25 = vector.load %arg4[%c0_19, %c0_20] : memref<16x256xf32, #tpu.memory_space<vmem>>, vector<16x256xf32>
    %cst_21 = arith.constant dense<0.000000e+00> : vector<1x256xf32>
    %26 = tpu.matmul %24, %25, %cst_21 {dimension_numbers = #tpu.dot_dimension_numbers<[1], [0], [0], [1], [0, 0, 1, 1], [], []>} : vector<1x16xf32>, vector<16x256xf32>, vector<1x256xf32> -> vector<1x256xf32>
    %27 = vector.broadcast %26 : vector<1x256xf32> to vector<2x256xf32>
    %28 = arith.mulf %12, %27 : vector<2x256xf32>
    %c0_22 = arith.constant 0 : index
    %c0_23 = arith.constant 0 : index
    %29 = vector.load %arg6[%c0_22, %c0_23] : memref<1x16xf32, #tpu.memory_space<vmem>>, vector<1x16xf32>
    %c0_24 = arith.constant 0 : index
    %c0_25 = arith.constant 0 : index
    %30 = vector.load %arg4[%c0_24, %c0_25] : memref<16x256xf32, #tpu.memory_space<vmem>>, vector<16x256xf32>
    %cst_26 = arith.constant dense<0.000000e+00> : vector<1x256xf32>
    %31 = tpu.matmul %29, %30, %cst_26 {dimension_numbers = #tpu.dot_dimension_numbers<[1], [0], [0], [1], [0, 0, 1, 1], [], []>} : vector<1x16xf32>, vector<16x256xf32>, vector<1x256xf32> -> vector<1x256xf32>
    %32 = vector.broadcast %31 : vector<1x256xf32> to vector<2x256xf32>
    %33 = arith.addf %28, %32 : vector<2x256xf32>
    %cst_27 = arith.constant 0.000000e+00 : f32
    %34 = vector.broadcast %cst_27 : f32 to vector<2x256xf32>
    %35 = arith.cmpf oge, %33, %34 : vector<2x256xf32>
    %cst_28 = arith.constant 2.000000e-01 : f32
    %36 = vector.broadcast %cst_28 : f32 to vector<2x256xf32>
    %37 = arith.mulf %36, %33 : vector<2x256xf32>
    %38 = arith.select %35, %33, %37 : vector<2x256xi1>, vector<2x256xf32>
    %39 = arith.truncf %38 : vector<2x256xf32> to vector<2x256xbf16>
    %c0_29 = arith.constant 0 : index
    %c0_30 = arith.constant 0 : index
    %40 = vector.load %arg7[%c0_29, %c0_30] : memref<256x128xbf16, #tpu.memory_space<vmem>>, vector<256x128xbf16>
    %cst_31 = arith.constant dense<0.000000e+00> : vector<2x128xf32>
    %41 = tpu.matmul %39, %40, %cst_31 {dimension_numbers = #tpu.dot_dimension_numbers<[1], [0], [0], [1], [0, 0, 1, 1], [], []>} : vector<2x256xbf16>, vector<256x128xbf16>, vector<2x128xf32> -> vector<2x128xf32>
    %cst_32 = arith.constant dense<0.000000e+00> : vector<128xf32>
    %42 = vector.multi_reduction <add>, %41, %cst_32 [0] : vector<2x128xf32> to vector<128xf32>
    %43 = vector.shape_cast %42 : vector<128xf32> to vector<1x128xf32>
    %c0_33 = arith.constant 0 : index
    %c0_34 = arith.constant 0 : index
    %44 = vector.load %arg8[%c0_33, %c0_34] : memref<128x32xf32, #tpu.memory_space<vmem>>, vector<128x32xf32>
    %cst_35 = arith.constant dense<0.000000e+00> : vector<1x32xf32>
    %45 = tpu.matmul %43, %44, %cst_35 {dimension_numbers = #tpu.dot_dimension_numbers<[1], [0], [0], [1], [0, 0, 1, 1], [], []>} : vector<1x128xf32>, vector<128x32xf32>, vector<1x32xf32> -> vector<1x32xf32>
    %cst_36 = arith.constant 8.000000e+00 : f32
    %46 = vector.broadcast %cst_36 : f32 to vector<1x32xf32>
    %47 = arith.divf %45, %46 : vector<1x32xf32>
    %c0_37 = arith.constant 0 : index
    %c0_38 = arith.constant 0 : index
    %48 = vector.load %arg9[%c0_37, %c0_38] : memref<32x128xf32, #tpu.memory_space<vmem>>, vector<32x128xf32>
    %cst_39 = arith.constant dense<0.000000e+00> : vector<1x128xf32>
    %49 = tpu.matmul %47, %48, %cst_39 {dimension_numbers = #tpu.dot_dimension_numbers<[1], [0], [0], [1], [0, 0, 1, 1], [], []>} : vector<1x32xf32>, vector<32x128xf32>, vector<1x128xf32> -> vector<1x128xf32>
    %50 = vector.broadcast %49 : vector<1x128xf32> to vector<2x128xf32>
    %51 = arith.subf %41, %50 : vector<2x128xf32>
    %52 = arith.mulf %51, %51 : vector<2x128xf32>
    %cst_40 = arith.constant dense<0.000000e+00> : vector<128xf32>
    %53 = vector.multi_reduction <add>, %52, %cst_40 [0] : vector<2x128xf32> to vector<128xf32>
    %54 = vector.shape_cast %53 : vector<128xf32> to vector<1x128xf32>
    %c0_41 = arith.constant 0 : index
    %c0_42 = arith.constant 0 : index
    %55 = vector.load %arg8[%c0_41, %c0_42] : memref<128x32xf32, #tpu.memory_space<vmem>>, vector<128x32xf32>
    %cst_43 = arith.constant dense<0.000000e+00> : vector<1x32xf32>
    %56 = tpu.matmul %54, %55, %cst_43 {dimension_numbers = #tpu.dot_dimension_numbers<[1], [0], [0], [1], [0, 0, 1, 1], [], []>} : vector<1x128xf32>, vector<128x32xf32>, vector<1x32xf32> -> vector<1x32xf32>
    %cst_44 = arith.constant 8.000000e+00 : f32
    %57 = vector.broadcast %cst_44 : f32 to vector<1x32xf32>
    %58 = arith.divf %56, %57 : vector<1x32xf32>
    %c0_45 = arith.constant 0 : index
    %c0_46 = arith.constant 0 : index
    %59 = vector.load %arg10[%c0_45, %c0_46] : memref<1x32xf32, #tpu.memory_space<vmem>>, vector<1x32xf32>
    %cst_47 = arith.constant 9.99999974E-6 : f32
    %60 = vector.broadcast %cst_47 : f32 to vector<1x32xf32>
    %61 = arith.addf %58, %60 : vector<1x32xf32>
    %62 = math.rsqrt %61 : vector<1x32xf32>
    %63 = arith.mulf %59, %62 : vector<1x32xf32>
    %c0_48 = arith.constant 0 : index
    %c0_49 = arith.constant 0 : index
    %64 = vector.load %arg9[%c0_48, %c0_49] : memref<32x128xf32, #tpu.memory_space<vmem>>, vector<32x128xf32>
    %cst_50 = arith.constant dense<0.000000e+00> : vector<1x128xf32>
    %65 = tpu.matmul %63, %64, %cst_50 {dimension_numbers = #tpu.dot_dimension_numbers<[1], [0], [0], [1], [0, 0, 1, 1], [], []>} : vector<1x32xf32>, vector<32x128xf32>, vector<1x128xf32> -> vector<1x128xf32>
    %66 = vector.broadcast %65 : vector<1x128xf32> to vector<2x128xf32>
    %67 = arith.mulf %51, %66 : vector<2x128xf32>
    %c0_51 = arith.constant 0 : index
    %c0_52 = arith.constant 0 : index
    %68 = vector.load %arg11[%c0_51, %c0_52] : memref<1x32xf32, #tpu.memory_space<vmem>>, vector<1x32xf32>
    %c0_53 = arith.constant 0 : index
    %c0_54 = arith.constant 0 : index
    %69 = vector.load %arg9[%c0_53, %c0_54] : memref<32x128xf32, #tpu.memory_space<vmem>>, vector<32x128xf32>
    %cst_55 = arith.constant dense<0.000000e+00> : vector<1x128xf32>
    %70 = tpu.matmul %68, %69, %cst_55 {dimension_numbers = #tpu.dot_dimension_numbers<[1], [0], [0], [1], [0, 0, 1, 1], [], []>} : vector<1x32xf32>, vector<32x128xf32>, vector<1x128xf32> -> vector<1x128xf32>
    %71 = vector.broadcast %70 : vector<1x128xf32> to vector<2x128xf32>
    %72 = arith.addf %67, %71 : vector<2x128xf32>
    %cst_56 = arith.constant 0.000000e+00 : f32
    %73 = vector.broadcast %cst_56 : f32 to vector<2x128xf32>
    %74 = arith.cmpf oge, %72, %73 : vector<2x128xf32>
    %cst_57 = arith.constant 2.000000e-01 : f32
    %75 = vector.broadcast %cst_57 : f32 to vector<2x128xf32>
    %76 = arith.mulf %75, %72 : vector<2x128xf32>
    %77 = arith.select %74, %72, %76 : vector<2x128xi1>, vector<2x128xf32>
    %c0_58 = arith.constant 0 : index
    %c0_59 = arith.constant 0 : index
    %78 = vector.load %arg12[%c0_58, %c0_59] : memref<128x1xf32, #tpu.memory_space<vmem>>, vector<128x1xf32>
    %cst_60 = arith.constant dense<0.000000e+00> : vector<2x1xf32>
    %79 = tpu.matmul %77, %78, %cst_60 {dimension_numbers = #tpu.dot_dimension_numbers<[1], [0], [0], [1], [0, 0, 1, 1], [], []>} : vector<2x128xf32>, vector<128x1xf32>, vector<2x1xf32> -> vector<2x1xf32>
    %c0_61 = arith.constant 0 : index
    %c0_62 = arith.constant 0 : index
    %80 = vector.load %arg13[%c0_61, %c0_62] : memref<1x1xf32, #tpu.memory_space<vmem>>, vector<1x1xf32>
    %81 = vector.broadcast %80 : vector<1x1xf32> to vector<2x1xf32>
    %82 = arith.addf %79, %81 : vector<2x1xf32>
    %83 = arith.negf %82 : vector<2x1xf32>
    %84 = math.exp %83 : vector<2x1xf32>
    %cst_63 = arith.constant 1.000000e+00 : f32
    %85 = vector.broadcast %cst_63 : f32 to vector<2x1xf32>
    %86 = arith.addf %85, %84 : vector<2x1xf32>
    %87 = arith.divf %85, %86 : vector<2x1xf32>
    %c0_64 = arith.constant 0 : index
    %c0_65 = arith.constant 0 : index
    %88 = vector.load %arg14[%c0_64, %c0_65] : memref<2x1xf32, #tpu.memory_space<vmem>>, vector<2x1xf32>
    tpu.vector_store %arg14[%c0_64, %c0_65], %87 {strides = array<i32>} : memref<2x1xf32, #tpu.memory_space<vmem>>, vector<2x1xf32>,
    return
  }
  func.func @transform_0(%arg0: i32) -> (i32, i32) {
    %c0_i32 = arith.constant 0 : i32
    %c0_i32_0 = arith.constant 0 : i32
    %c0_i32_1 = arith.constant 0 : i32
    return %c0_i32, %c0_i32_0 : i32, i32
  }
  func.func @transform_1(%arg0: i32) -> (i32, i32) {
    %c0_i32 = arith.constant 0 : i32
    %c0_i32_0 = arith.constant 0 : i32
    %c0_i32_1 = arith.constant 0 : i32
    return %c0_i32, %c0_i32_0 : i32, i32
  }
  func.func @transform_2(%arg0: i32) -> (i32, i32) {
    %c0_i32 = arith.constant 0 : i32
    %c0_i32_0 = arith.constant 0 : i32
    %c0_i32_1 = arith.constant 0 : i32
    return %c0_i32, %c0_i32_0 : i32, i32
  }
  func.func @transform_3(%arg0: i32) -> (i32, i32) {
    %c0_i32 = arith.constant 0 : i32
    %c0_i32_0 = arith.constant 0 : i32
    %c0_i32_1 = arith.constant 0 : i32
    return %c0_i32, %c0_i32_0 : i32, i32
  }
  func.func @transform_4(%arg0: i32) -> (i32, i32) {
    %c0_i32 = arith.constant 0 : i32
    %c0_i32_0 = arith.constant 0 : i32
    %c0_i32_1 = arith.constant 0 : i32
    return %c0_i32, %c0_i32_0 : i32, i32
  }
  func.func @transform_5(%arg0: i32) -> (i32, i32) {
    %c0_i32 = arith.constant 0 : i32
    %c0_i32_0 = arith.constant 0 : i32
    %c0_i32_1 = arith.constant 0 : i32
    return %c0_i32, %c0_i32_0 : i32, i32
  }
  func.func @transform_6(%arg0: i32) -> (i32, i32) {
    %c0_i32 = arith.constant 0 : i32
    %c0_i32_0 = arith.constant 0 : i32
    %c0_i32_1 = arith.constant 0 : i32
    return %c0_i32, %c0_i32_0 : i32, i32
  }
  func.func @transform_7(%arg0: i32) -> (i32, i32) {
    %c0_i32 = arith.constant 0 : i32
    %c0_i32_0 = arith.constant 0 : i32
    %c0_i32_1 = arith.constant 0 : i32
    return %c0_i32, %c0_i32_0 : i32, i32
  }
  func.func @transform_8(%arg0: i32) -> (i32, i32) {
    %c0_i32 = arith.constant 0 : i32
    %c0_i32_0 = arith.constant 0 : i32
    %c0_i32_1 = arith.constant 0 : i32
    return %c0_i32, %c0_i32_0 : i32, i32
  }
  func.func @transform_9(%arg0: i32) -> (i32, i32) {
    %c0_i32 = arith.constant 0 : i32
    %c0_i32_0 = arith.constant 0 : i32
    %c0_i32_1 = arith.constant 0 : i32
    return %c0_i32, %c0_i32_0 : i32, i32
  }
  func.func @transform_10(%arg0: i32) -> (i32, i32) {
    %c0_i32 = arith.constant 0 : i32
    %c0_i32_0 = arith.constant 0 : i32
    %c0_i32_1 = arith.constant 0 : i32
    return %c0_i32, %c0_i32_0 : i32, i32
  }
  func.func @transform_11(%arg0: i32) -> (i32, i32) {
    %c0_i32 = arith.constant 0 : i32
    %c0_i32_0 = arith.constant 0 : i32
    %c0_i32_1 = arith.constant 0 : i32
    return %c0_i32, %c0_i32_0 : i32, i32
  }
  func.func @transform_12(%arg0: i32) -> (i32, i32) {
    %c0_i32 = arith.constant 0 : i32
    %c0_i32_0 = arith.constant 0 : i32
    %c0_i32_1 = arith.constant 0 : i32
    return %c0_i32, %c0_i32_0 : i32, i32
  }
  func.func @transform_13(%arg0: i32) -> (i32, i32) {
    %c0_i32 = arith.constant 0 : i32
    %c0_i32_0 = arith.constant 0 : i32
    %c0_i32_1 = arith.constant 0 : i32
    return %c0_i32, %c0_i32_0 : i32, i32
  }
}

</mosaic_0001>

<llo_original>
// kernel: discriminator_forward.3
$region0: #{discriminator_forward.3}
  #allocation0 [shape = 'u32[]', space=smem, size = 0x4, offset = 0x4, fixed_abs, tag = 'smem constant byte address 0x4 - core index']
  #allocation1 [shape = 'u32[72,128]{1,0:T(1,128)}', space=vmem, size = 0x9000, scoped, tag = 'internal scratch']
  %s0 = inlined_call_operand.vmem [shape: bf16[4,64], index: 0, kind: input, shape index: {}]
  %s1 = inlined_call_operand.vmem [shape: bf16[64,512], index: 1, kind: input, shape index: {}]
  %s2 = inlined_call_operand.vmem [shape: f32[4,1], index: 2, kind: input, shape index: {}]
  %s3 = inlined_call_operand.vmem [shape: f32[4,1], index: 3, kind: input, shape index: {}]
  %s4 = inlined_call_operand.vmem [shape: f32[4,512], index: 4, kind: output, shape index: {}]
  %s5 = sld [smem:[#allocation0]]
  $region26: #{discriminator_forward.3} parent=0
    _
  %s7 = ssub.s32 1, %s5
  %s8 = scalar_select 0, %s7, %s5
  // Predicated region
  $region2: #{discriminator_forward.3} parent=0 // pred_check
    _
  $region3: #{discriminator_forward.3} parent=0 // pred_check_branch
    %10 = sbr.rel (0) target = $region5
  $region4: #{discriminator_forward.3} parent=0 // pred_region
    _
  $region5: #{discriminator_forward.3} parent=0 // pred_fallthru
    _
  // Predicated region
  $region6: #{discriminator_forward.3} parent=0 // pred_check
    _
  $region7: #{discriminator_forward.3} parent=0 // pred_check_branch
    %12 = sbr.rel (0) target = $region9
  $region8: #{discriminator_forward.3} parent=0 // pred_region
    _
  $region9: #{discriminator_forward.3} parent=0 // pred_fallthru
    _
  // Predicated region
  $region10: #{discriminator_forward.3} parent=0 // pred_check
    _
  $region11: #{discriminator_forward.3} parent=0 // pred_check_branch
    %14 = sbr.rel (0) target = $region13
  $region12: #{discriminator_forward.3} parent=0 // pred_region
    _
  $region13: #{discriminator_forward.3} parent=0 // pred_fallthru
    _
  // Predicated region
  $region14: #{discriminator_forward.3} parent=0 // pred_check
    _
  $region15: #{discriminator_forward.3} parent=0 // pred_check_branch
    %16 = sbr.rel (0) target = $region17
  $region16: #{discriminator_forward.3} parent=0 // pred_region
    _
  $region17: #{discriminator_forward.3} parent=0 // pred_fallthru
    _
  %v18 = vld [vmem:[%s0] sm:$0x3]
  %v19 = vld [vmem:[%s1] sm:$0xff]
  %v20 = vld [vmem:[%s1 + $0x8] sm:$0xff]
  %v21 = vld [vmem:[%s1 + $0x10] sm:$0xff]
  %v22 = vld [vmem:[%s1 + $0x18] sm:$0xff]
  %v23 = vld [vmem:[%s1 + $0x20] sm:$0xff]
  %v24 = vld [vmem:[%s1 + $0x28] sm:$0xff]
  %v25 = vld [vmem:[%s1 + $0x30] sm:$0xff]
  %v26 = vld [vmem:[%s1 + $0x38] sm:$0xff]
  %v27 = vld [vmem:[%s1 + $0x40] sm:$0xff]
  %v28 = vld [vmem:[%s1 + $0x48] sm:$0xff]
  %v29 = vld [vmem:[%s1 + $0x50] sm:$0xff]
  %v30 = vld [vmem:[%s1 + $0x58] sm:$0xff]
  %v31 = vld [vmem:[%s1 + $0x60] sm:$0xff]
  %v32 = vld [vmem:[%s1 + $0x68] sm:$0xff]
  %v33 = vld [vmem:[%s1 + $0x70] sm:$0xff]
  %v34 = vld [vmem:[%s1 + $0x78] sm:$0xff]
  %v51 = vunpack.c.l.b16 %v19
  %v52 = vunpack.c.h.b16 %v19
  %v53 = vunpack.c.l.b16 %v20
  %v54 = vunpack.c.h.b16 %v20
  %v55 = vunpack.c.l.b16 %v21
  %v56 = vunpack.c.h.b16 %v21
  %v57 = vunpack.c.l.b16 %v22
  %v58 = vunpack.c.h.b16 %v22
  %v59 = vunpack.c.l.b16 %v23
  %v60 = vunpack.c.h.b16 %v23
  %v61 = vunpack.c.l.b16 %v24
  %v62 = vunpack.c.h.b16 %v24
  %v63 = vunpack.c.l.b16 %v25
  %v64 = vunpack.c.h.b16 %v25
  %v65 = vunpack.c.l.b16 %v26
  %v66 = vunpack.c.h.b16 %v26
  %v67 = vunpack.c.l.b16 %v27
  %v68 = vunpack.c.h.b16 %v27
  %v69 = vunpack.c.l.b16 %v28
  %v70 = vunpack.c.h.b16 %v28
  %v71 = vunpack.c.l.b16 %v29
  %v72 = vunpack.c.h.b16 %v29
  %v73 = vunpack.c.l.b16 %v30
  %v74 = vunpack.c.h.b16 %v30
  %v75 = vunpack.c.l.b16 %v31
  %v76 = vunpack.c.h.b16 %v31
  %v77 = vunpack.c.l.b16 %v32
  %v78 = vunpack.c.h.b16 %v32
  %v79 = vunpack.c.l.b16 %v33
  %v80 = vunpack.c.h.b16 %v33
  %v81 = vunpack.c.l.b16 %v34
  %v82 = vunpack.c.h.b16 %v34
  %v83 = vpack.c.b16 %v55, %v51
  %v84 = vpack.c.b16 %v56, %v52
  %v85 = vpack.c.b16 %v57, %v53
  %v86 = vpack.c.b16 %v58, %v54
  %v87 = vpack.c.b16 %v63, %v59
  %v88 = vpack.c.b16 %v64, %v60
  %v89 = vpack.c.b16 %v65, %v61
  %v90 = vpack.c.b16 %v66, %v62
  %v91 = vpack.c.b16 %v71, %v67
  %v92 = vpack.c.b16 %v72, %v68
  %v93 = vpack.c.b16 %v73, %v69
  %v94 = vpack.c.b16 %v74, %v70
  %v95 = vpack.c.b16 %v79, %v75
  %v96 = vpack.c.b16 %v80, %v76
  %v97 = vpack.c.b16 %v81, %v77
  %v98 = vpack.c.b16 %v82, %v78
  %vm115 = vcmask 523264
  %v117 = vsel %vm115, %v18, 0
  %119 = vmatpush.bf16.msra.mxu0 0
  %120 = vmatpush.bf16.msra.mxu0 0
  %121 = vmatpush.bf16.msra.mxu0 0
  %122 = vmatpush.bf16.msra.mxu0 0
  %123 = vmatpush.bf16.msra.mxu0 %v95
  %124 = vmatpush.bf16.msra.mxu0 %v91
  %125 = vmatpush.bf16.msra.mxu0 %v87
  %126 = vmatpush.bf16.msra.mxu0 %v83
  %127 = vmatmul.bf16.gmra.mxu0 %v117
  %v128 = vpop.f32.mrf.mxu0
  %v129 = vadd.f32 0.0, %v128
  %v130 = vpop.f32.mrf.mxu0
  %131 = vdwg.mxu0
  %132 = vmatpush.bf16.msra.mxu0 0
  %133 = vmatpush.bf16.msra.mxu0 0
  %134 = vmatpush.bf16.msra.mxu0 0
  %135 = vmatpush.bf16.msra.mxu0 0
  %136 = vmatpush.bf16.msra.mxu0 %v96
  %137 = vmatpush.bf16.msra.mxu0 %v92
  %138 = vmatpush.bf16.msra.mxu0 %v88
  %139 = vmatpush.bf16.msra.mxu0 %v84
  %140 = vmatmul.bf16.gmra.mxu0 %v117
  %v141 = vpop.f32.mrf.mxu0
  %v142 = vadd.f32 0.0, %v141
  %v143 = vpop.f32.mrf.mxu0
  %144 = vdwg.mxu0
  %145 = vmatpush.bf16.msra.mxu0 0
  %146 = vmatpush.bf16.msra.mxu0 0
  %147 = vmatpush.bf16.msra.mxu0 0
  %148 = vmatpush.bf16.msra.mxu0 0
  %149 = vmatpush.bf16.msra.mxu0 %v97
  %150 = vmatpush.bf16.msra.mxu0 %v93
  %151 = vmatpush.bf16.msra.mxu0 %v89
  %152 = vmatpush.bf16.msra.mxu0 %v85
  %153 = vmatmul.bf16.gmra.mxu0 %v117
  %v154 = vpop.f32.mrf.mxu0
  %v155 = vadd.f32 0.0, %v154
  %v156 = vpop.f32.mrf.mxu0
  %157 = vdwg.mxu0
  %158 = vmatpush.bf16.msra.mxu0 0
  %159 = vmatpush.bf16.msra.mxu0 0
  %160 = vmatpush.bf16.msra.mxu0 0
  %161 = vmatpush.bf16.msra.mxu0 0
  %162 = vmatpush.bf16.msra.mxu0 %v98
  %163 = vmatpush.bf16.msra.mxu0 %v94
  %164 = vmatpush.bf16.msra.mxu0 %v90
  %165 = vmatpush.bf16.msra.mxu0 %v86
  %166 = vmatmul.bf16.gmra.mxu0 %v117
  %v167 = vpop.f32.mrf.mxu0
  %v168 = vadd.f32 0.0, %v167
  %v169 = vpop.f32.mrf.mxu0
  %170 = vdwg.mxu0
  %vm171 = vcmask 1043456
  %v172 = vsel %vm171, %v129, 0.0
  %v173 = vsel %vm171, %v142, 0.0
  %v174 = vadd.f32 %v172, %v173
  %v175 = vsel %vm171, %v155, 0.0
  %v176 = vadd.f32 %v174, %v175
  %v177 = vsel %vm171, %v168, 0.0
  %v178 = vadd.f32 %v176, %v177
  %179 = vadd.xlane.f32.xlu0 %v178
  %v180 = vpop.xlane.xlu0 %179
  %v181 = vrcp.pop 512.0
  %v182 = vmul.f32 512.0, %v181
  %v183 = vsub.f32 1.0, %v182
  %v184 = vmul.f32 %v181, %v183
  %v185 = vadd.f32 %v181, %v184
  %vm186 = vweird.f32 %v181
  %v187 = vsel %vm186, %v181, %v185
  %v188 = vmul.f32 %v180, %v187
  %v189 = vsub.f32 %v129, %v188
  %v190 = vsub.f32 %v142, %v188
  %v191 = vsub.f32 %v155, %v188
  %v192 = vsub.f32 %v168, %v188
  %v193 = vmul.f32 %v189, %v189
  %v194 = vmul.f32 %v190, %v190
  %v195 = vmul.f32 %v191, %v191
  %v196 = vmul.f32 %v192, %v192
  %v197 = vsel %vm171, %v193, 0.0
  %v198 = vsel %vm171, %v194, 0.0
  %v199 = vadd.f32 %v197, %v198
  %v200 = vsel %vm171, %v195, 0.0
  %v201 = vadd.f32 %v199, %v200
  %v202 = vsel %vm171, %v196, 0.0
  %v203 = vadd.f32 %v201, %v202
  %204 = vadd.xlane.f32.xlu0 %v203
  %v205 = vpop.xlane.xlu0 %204
  %v206 = vmul.f32 %v205, %v187
  %v207 = vld [vmem:[%s2] sm:$0xf]
  %v208 = vadd.f32 %v206, 1e-05
  %v209 = vrsqrt.pop %v208
  %v210 = vmul.f32 %v209, %v208
  %v211 = vmul.f32 %v210, %v209
  %v212 = vmul.f32 0.5, %v211
  %v213 = vsub.f32 1.5, %v212
  %v214 = vmul.f32 %v209, %v213
  %vm215 = vweird.f32 %v208
  %vm216 = vweird.f32 %v209
  %vm217 = vmor %vm215, %vm216
  %v218 = vsel %vm217, %v209, %v214
  %v219 = vmul.f32 %v207, %v218
  %221 = vset.pattern.permute.xlu0 0
  %222 = vperm.xlu0 %221, %v219
  %v223 = vpop.permute.xlu0 %222
  %v225 = vmul.f32 %v189, %v223
  %v226 = vmul.f32 %v190, %v223
  %v227 = vmul.f32 %v191, %v223
  %v228 = vmul.f32 %v192, %v223
  %v229 = vld [vmem:[%s3] sm:$0xf]
  %231 = vset.pattern.permute.xlu0 0
  %232 = vperm.xlu0 %231, %v229
  %v233 = vpop.permute.xlu0 %232
  %v235 = vadd.f32 %v225, %v233
  %v236 = vadd.f32 %v226, %v233
  %v237 = vadd.f32 %v227, %v233
  %v238 = vadd.f32 %v228, %v233
  %vm239 = vcmp.ge.f32.partialorder %v235, 0.0
  %vm240 = vcmp.ge.f32.partialorder %v236, 0.0
  %vm241 = vcmp.ge.f32.partialorder %v237, 0.0
  %vm242 = vcmp.ge.f32.partialorder %v238, 0.0
  %v243 = vmul.f32 %v235, 0.2
  %v244 = vmul.f32 %v236, 0.2
  %v245 = vmul.f32 %v237, 0.2
  %v246 = vmul.f32 %v238, 0.2
  %v247 = vsel %vm239, %v235, %v243
  %v248 = vsel %vm240, %v236, %v244
  %v249 = vsel %vm241, %v237, %v245
  %v250 = vsel %vm242, %v238, %v246
  %v255 = vrot.slane %v248, 4
  %v256 = vrot.slane %v250, 4
  %v257 = vsel %vm171, %v247, %v255
  %v258 = vsel %vm171, %v249, %v256
  %261 = vst [vmem:[%s4] sm:$0xff] %v257
  %262 = vst [vmem:[%s4 + $0x8] sm:$0xff] %v258
  // Predicated region
  $region18: #{discriminator_forward.3} parent=0 // pred_check
    _
  $region19: #{discriminator_forward.3} parent=0 // pred_check_branch
    %264 = sbr.rel (0) target = $region21
  $region20: #{discriminator_forward.3} parent=0 // pred_region
    _
  $region21: #{discriminator_forward.3} parent=0 // pred_fallthru
    _
  // Predicated region
  $region22: #{discriminator_forward.3} parent=0 // pred_check
    _
  $region23: #{discriminator_forward.3} parent=0 // pred_check_branch
    %266 = sbr.rel (0) target = $region25
  $region24: #{discriminator_forward.3} parent=0 // pred_region
    _
  $region25: #{discriminator_forward.3} parent=0 // pred_fallthru
    _

// kernel: discriminator_forward.4
$region0: #{discriminator_forward.4}
  #allocation0 [shape = 'u32[]', space=smem, size = 0x4, offset = 0x4, fixed_abs, tag = 'smem constant byte address 0x4 - core index']
  #allocation1 [shape = 'u32[72,128]{1,0:T(1,128)}', space=vmem, size = 0x9000, scoped, tag = 'internal scratch']
  %s0 = inlined_call_operand.vmem [shape: bf16[8,64], index: 0, kind: input, shape index: {}]
  %s1 = inlined_call_operand.vmem [shape: bf16[64,128], index: 1, kind: input, shape index: {}]
  %s2 = inlined_call_operand.vmem [shape: f32[8,1], index: 2, kind: input, shape index: {}]
  %s3 = inlined_call_operand.vmem [shape: f32[8,1], index: 3, kind: input, shape index: {}]
  %s4 = inlined_call_operand.vmem [shape: f32[8,128], index: 4, kind: output, shape index: {}]
  %s5 = sld [smem:[#allocation0]]
  $region26: #{discriminator_forward.4} parent=0
    _
  %s7 = ssub.s32 1, %s5
  %s8 = scalar_select 0, %s7, %s5
  // Predicated region
  $region2: #{discriminator_forward.4} parent=0 // pred_check
    _
  $region3: #{discriminator_forward.4} parent=0 // pred_check_branch
    %10 = sbr.rel (0) target = $region5
  $region4: #{discriminator_forward.4} parent=0 // pred_region
    _
  $region5: #{discriminator_forward.4} parent=0 // pred_fallthru
    _
  // Predicated region
  $region6: #{discriminator_forward.4} parent=0 // pred_check
    _
  $region7: #{discriminator_forward.4} parent=0 // pred_check_branch
    %12 = sbr.rel (0) target = $region9
  $region8: #{discriminator_forward.4} parent=0 // pred_region
    _
  $region9: #{discriminator_forward.4} parent=0 // pred_fallthru
    _
  // Predicated region
  $region10: #{discriminator_forward.4} parent=0 // pred_check
    _
  $region11: #{discriminator_forward.4} parent=0 // pred_check_branch
    %14 = sbr.rel (0) target = $region13
  $region12: #{discriminator_forward.4} parent=0 // pred_region
    _
  $region13: #{discriminator_forward.4} parent=0 // pred_fallthru
    _
  // Predicated region
  $region14: #{discriminator_forward.4} parent=0 // pred_check
    _
  $region15: #{discriminator_forward.4} parent=0 // pred_check_branch
    %16 = sbr.rel (0) target = $region17
  $region16: #{discriminator_forward.4} parent=0 // pred_region
    _
  $region17: #{discriminator_forward.4} parent=0 // pred_fallthru
    _
  %v18 = vld [vmem:[%s0] sm:$0xf]
  %v19 = vld [vmem:[%s1] sm:$0xf]
  %v20 = vld [vmem:[%s1 + $0x4] sm:$0xf]
  %v21 = vld [vmem:[%s1 + $0x8] sm:$0xf]
  %v22 = vld [vmem:[%s1 + $0xc] sm:$0xf]
  %v23 = vld [vmem:[%s1 + $0x10] sm:$0xf]
  %v24 = vld [vmem:[%s1 + $0x14] sm:$0xf]
  %v25 = vld [vmem:[%s1 + $0x18] sm:$0xf]
  %v26 = vld [vmem:[%s1 + $0x1c] sm:$0xf]
  %v35 = vunpack.c.l.b16 %v19
  %v36 = vunpack.c.l.b16 %v20
  %v37 = vunpack.c.l.b16 %v21
  %v38 = vunpack.c.l.b16 %v22
  %v39 = vunpack.c.l.b16 %v23
  %v40 = vunpack.c.l.b16 %v24
  %v41 = vunpack.c.l.b16 %v25
  %v42 = vunpack.c.l.b16 %v26
  %v43 = vpack.c.b16 %v36, %v35
  %v44 = vpack.c.b16 %v38, %v37
  %v45 = vpack.c.b16 %v40, %v39
  %v46 = vpack.c.b16 %v42, %v41
  %vm51 = vcmask 523264
  %v53 = vsel %vm51, %v18, 0
  %55 = vmatpush.bf16.msra.mxu0 0
  %56 = vmatpush.bf16.msra.mxu0 0
  %57 = vmatpush.bf16.msra.mxu0 0
  %58 = vmatpush.bf16.msra.mxu0 0
  %59 = vmatpush.bf16.msra.mxu0 %v46
  %60 = vmatpush.bf16.msra.mxu0 %v45
  %61 = vmatpush.bf16.msra.mxu0 %v44
  %62 = vmatpush.bf16.msra.mxu0 %v43
  %63 = vmatmul.bf16.gmra.mxu0 %v53
  %v64 = vpop.f32.mrf.mxu0
  %v65 = vadd.f32 0.0, %v64
  %v66 = vpop.f32.mrf.mxu0
  %67 = vdwg.mxu0
  %68 = vadd.xlane.f32.xlu0 %v65
  %v69 = vpop.xlane.xlu0 %68
  %v70 = vrcp.pop 128.0
  %v71 = vmul.f32 128.0, %v70
  %v72 = vsub.f32 1.0, %v71
  %v73 = vmul.f32 %v70, %v72
  %v74 = vadd.f32 %v70, %v73
  %vm75 = vweird.f32 %v70
  %v76 = vsel %vm75, %v70, %v74
  %v77 = vmul.f32 %v69, %v76
  %v78 = vsub.f32 %v65, %v77
  %v79 = vmul.f32 %v78, %v78
  %80 = vadd.xlane.f32.xlu0 %v79
  %v81 = vpop.xlane.xlu0 %80
  %v82 = vmul.f32 %v81, %v76
  %v83 = vld [vmem:[%s2] sm:$0xff]
  %v84 = vadd.f32 %v82, 1e-05
  %v85 = vrsqrt.pop %v84
  %v86 = vmul.f32 %v85, %v84
  %v87 = vmul.f32 %v86, %v85
  %v88 = vmul.f32 0.5, %v87
  %v89 = vsub.f32 1.5, %v88
  %v90 = vmul.f32 %v85, %v89
  %vm91 = vweird.f32 %v84
  %vm92 = vweird.f32 %v85
  %vm93 = vmor %vm91, %vm92
  %v94 = vsel %vm93, %v85, %v90
  %v95 = vmul.f32 %v83, %v94
  %97 = vset.pattern.permute.xlu0 0
  %98 = vperm.xlu0 %97, %v95
  %v99 = vpop.permute.xlu0 %98
  %v101 = vmul.f32 %v78, %v99
  %v102 = vld [vmem:[%s3] sm:$0xff]
  %104 = vset.pattern.permute.xlu0 0
  %105 = vperm.xlu0 %104, %v102
  %v106 = vpop.permute.xlu0 %105
  %v108 = vadd.f32 %v101, %v106
  %vm109 = vcmp.ge.f32.partialorder %v108, 0.0
  %v110 = vmul.f32 %v108, 0.2
  %v111 = vsel %vm109, %v108, %v110
  %112 = vst [vmem:[%s4] sm:$0xff] %v111
  // Predicated region
  $region18: #{discriminator_forward.4} parent=0 // pred_check
    _
  $region19: #{discriminator_forward.4} parent=0 // pred_check_branch
    %114 = sbr.rel (0) target = $region21
  $region20: #{discriminator_forward.4} parent=0 // pred_region
    _
  $region21: #{discriminator_forward.4} parent=0 // pred_fallthru
    _
  // Predicated region
  $region22: #{discriminator_forward.4} parent=0 // pred_check
    _
  $region23: #{discriminator_forward.4} parent=0 // pred_check_branch
    %116 = sbr.rel (0) target = $region25
  $region24: #{discriminator_forward.4} parent=0 // pred_region
    _
  $region25: #{discriminator_forward.4} parent=0 // pred_fallthru
    _

// kernel: discriminator_forward.5
$region0: #{discriminator_forward.5}
  #allocation0 [shape = 'u32[]', space=smem, size = 0x4, offset = 0x4, fixed_abs, tag = 'smem constant byte address 0x4 - core index']
  #allocation1 [shape = 'u32[72,128]{1,0:T(1,128)}', space=vmem, size = 0x9000, scoped, tag = 'internal scratch']
  #allocation2 [shape = 'f32[1,1]{1,0:T(1,128)S(1)}', space=vmem, size = 0x200, scoped, tag = 'scoped memory for discriminator_forward.5']
  %s0 = inlined_call_operand.vmem [shape: bf16[2,512], index: 0, kind: input, shape index: {}]
  %s1 = inlined_call_operand.vmem [shape: bf16[512,256], index: 1, kind: input, shape index: {}]
  %s2 = inlined_call_operand.vmem [shape: f32[256,16], index: 2, kind: input, shape index: {}]
  %s3 = inlined_call_operand.vmem [shape: f32[16,256], index: 3, kind: input, shape index: {}]
  %s4 = inlined_call_operand.vmem [shape: f32[1,16], index: 4, kind: input, shape index: {}]
  %s5 = inlined_call_operand.vmem [shape: f32[1,16], index: 5, kind: input, shape index: {}]
  %s6 = inlined_call_operand.vmem [shape: bf16[256,128], index: 6, kind: input, shape index: {}]
  %s7 = inlined_call_operand.vmem [shape: f32[128,32], index: 7, kind: input, shape index: {}]
  %s8 = inlined_call_operand.vmem [shape: f32[32,128], index: 8, kind: input, shape index: {}]
  %s9 = inlined_call_operand.vmem [shape: f32[1,32], index: 9, kind: input, shape index: {}]
  %s10 = inlined_call_operand.vmem [shape: f32[1,32], index: 10, kind: input, shape index: {}]
  %s11 = inlined_call_operand.vmem [shape: f32[128,1], index: 11, kind: input, shape index: {}]
  %s12 = inlined_call_operand.<no memory space> [shape: f32[1,1], index: 12, kind: input, shape index: {}]
  %s13 = inlined_call_operand.vmem [shape: f32[2,1], index: 13, kind: output, shape index: {}]
  %s14 = sld [smem:[#allocation0]]
  $region62: #{discriminator_forward.5} parent=0
    _
  %s16 = ssub.s32 1, %s14
  %s17 = scalar_select 0, %s16, %s14
  %v18 = vstv %s12
  %19 = vst [vmem:[#allocation2] sm:$0x1] %v18
  // Predicated region
  $region2: #{discriminator_forward.5} parent=0 // pred_check
    _
  $region3: #{discriminator_forward.5} parent=0 // pred_check_branch
    %21 = sbr.rel (0) target = $region5
  $region4: #{discriminator_forward.5} parent=0 // pred_region
    _
  $region5: #{discriminator_forward.5} parent=0 // pred_fallthru
    _
  // Predicated region
  $region6: #{discriminator_forward.5} parent=0 // pred_check
    _
  $region7: #{discriminator_forward.5} parent=0 // pred_check_branch
    %23 = sbr.rel (0) target = $region9
  $region8: #{discriminator_forward.5} parent=0 // pred_region
    _
  $region9: #{discriminator_forward.5} parent=0 // pred_fallthru
    _
  // Predicated region
  $region10: #{discriminator_forward.5} parent=0 // pred_check
    _
  $region11: #{discriminator_forward.5} parent=0 // pred_check_branch
    %25 = sbr.rel (0) target = $region13
  $region12: #{discriminator_forward.5} parent=0 // pred_region
    _
  $region13: #{discriminator_forward.5} parent=0 // pred_fallthru
    _
  // Predicated region
  $region14: #{discriminator_forward.5} parent=0 // pred_check
    _
  $region15: #{discriminator_forward.5} parent=0 // pred_check_branch
    %27 = sbr.rel (0) target = $region17
  $region16: #{discriminator_forward.5} parent=0 // pred_region
    _
  $region17: #{discriminator_forward.5} parent=0 // pred_fallthru
    _
  // Predicated region
  $region18: #{discriminator_forward.5} parent=0 // pred_check
    _
  $region19: #{discriminator_forward.5} parent=0 // pred_check_branch
    %29 = sbr.rel (0) target = $region21
  $region20: #{discriminator_forward.5} parent=0 // pred_region
    _
  $region21: #{discriminator_forward.5} parent=0 // pred_fallthru
    _
  // Predicated region
  $region22: #{discriminator_forward.5} parent=0 // pred_check
    _
  $region23: #{discriminator_forward.5} parent=0 // pred_check_branch
    %31 = sbr.rel (0) target = $region25
  $region24: #{discriminator_forward.5} parent=0 // pred_region
    _
  $region25: #{discriminator_forward.5} parent=0 // pred_fallthru
    _
  // Predicated region
  $region26: #{discriminator_forward.5} parent=0 // pred_check
    _
  $region27: #{discriminator_forward.5} parent=0 // pred_check_branch
    %33 = sbr.rel (0) target = $region29
  $region28: #{discriminator_forward.5} parent=0 // pred_region
    _
  $region29: #{discriminator_forward.5} parent=0 // pred_fallthru
    _
  // Predicated region
  $region30: #{discriminator_forward.5} parent=0 // pred_check
    _
  $region31: #{discriminator_forward.5} parent=0 // pred_check_branch
    %35 = sbr.rel (0) target = $region33
  $region32: #{discriminator_forward.5} parent=0 // pred_region
    _
  $region33: #{discriminator_forward.5} parent=0 // pred_fallthru
    _
  // Predicated region
  $region34: #{discriminator_forward.5} parent=0 // pred_check
    _
  $region35: #{discriminator_forward.5} parent=0 // pred_check_branch
    %37 = sbr.rel (0) target = $region37
  $region36: #{discriminator_forward.5} parent=0 // pred_region
    _
  $region37: #{discriminator_forward.5} parent=0 // pred_fallthru
    _
  // Predicated region
  $region38: #{discriminator_forward.5} parent=0 // pred_check
    _
  $region39: #{discriminator_forward.5} parent=0 // pred_check_branch
    %39 = sbr.rel (0) target = $region41
  $region40: #{discriminator_forward.5} parent=0 // pred_region
    _
  $region41: #{discriminator_forward.5} parent=0 // pred_fallthru
    _
  // Predicated region
  $region42: #{discriminator_forward.5} parent=0 // pred_check
    _
  $region43: #{discriminator_forward.5} parent=0 // pred_check_branch
    %41 = sbr.rel (0) target = $region45
  $region44: #{discriminator_forward.5} parent=0 // pred_region
    _
  $region45: #{discriminator_forward.5} parent=0 // pred_fallthru
    _
  // Predicated region
  $region46: #{discriminator_forward.5} parent=0 // pred_check
    _
  $region47: #{discriminator_forward.5} parent=0 // pred_check_branch
    %43 = sbr.rel (0) target = $region49
  $region48: #{discriminator_forward.5} parent=0 // pred_region
    _
  $region49: #{discriminator_forward.5} parent=0 // pred_fallthru
    _
  // Predicated region
  $region50: #{discriminator_forward.5} parent=0 // pred_check
    _
  $region51: #{discriminator_forward.5} parent=0 // pred_check_branch
    %45 = sbr.rel (0) target = $region53
  $region52: #{discriminator_forward.5} parent=0 // pred_region
    _
  $region53: #{discriminator_forward.5} parent=0 // pred_fallthru
    _
  %v46 = vld [vmem:[%s0] sm:$0xf]
  %v47 = vld [vmem:[%s1] sm:$0xff]
  %v48 = vld [vmem:[%s1 + $0x8] sm:$0xff]
  %v49 = vld [vmem:[%s1 + $0x10] sm:$0xff]
  %v50 = vld [vmem:[%s1 + $0x18] sm:$0xff]
  %v51 = vld [vmem:[%s1 + $0x20] sm:$0xff]
  %v52 = vld [vmem:[%s1 + $0x28] sm:$0xff]
  %v53 = vld [vmem:[%s1 + $0x30] sm:$0xff]
  %v54 = vld [vmem:[%s1 + $0x38] sm:$0xff]
  %v55 = vld [vmem:[%s1 + $0x40] sm:$0xff]
  %v56 = vld [vmem:[%s1 + $0x48] sm:$0xff]
  %v57 = vld [vmem:[%s1 + $0x50] sm:$0xff]
  %v58 = vld [vmem:[%s1 + $0x58] sm:$0xff]
  %v59 = vld [vmem:[%s1 + $0x60] sm:$0xff]
  %v60 = vld [vmem:[%s1 + $0x68] sm:$0xff]
  %v61 = vld [vmem:[%s1 + $0x70] sm:$0xff]
  %v62 = vld [vmem:[%s1 + $0x78] sm:$0xff]
  %v63 = vld [vmem:[%s1 + $0x80] sm:$0xff]
  %v64 = vld [vmem:[%s1 + $0x88] sm:$0xff]
  %v65 = vld [vmem:[%s1 + $0x90] sm:$0xff]
  %v66 = vld [vmem:[%s1 + $0x98] sm:$0xff]
  %v67 = vld [vmem:[%s1 + $0xa0] sm:$0xff]
  %v68 = vld [vmem:[%s1 + $0xa8] sm:$0xff]
  %v69 = vld [vmem:[%s1 + $0xb0] sm:$0xff]
  %v70 = vld [vmem:[%s1 + $0xb8] sm:$0xff]
  %v71 = vld [vmem:[%s1 + $0xc0] sm:$0xff]
  %v72 = vld [vmem:[%s1 + $0xc8] sm:$0xff]
  %v73 = vld [vmem:[%s1 + $0xd0] sm:$0xff]
  %v74 = vld [vmem:[%s1 + $0xd8] sm:$0xff]
  %v75 = vld [vmem:[%s1 + $0xe0] sm:$0xff]
  %v76 = vld [vmem:[%s1 + $0xe8] sm:$0xff]
  %v77 = vld [vmem:[%s1 + $0xf0] sm:$0xff]
  %v78 = vld [vmem:[%s1 + $0xf8] sm:$0xff]
  %v79 = vld [vmem:[%s1 + $0x100] sm:$0xff]
  %v80 = vld [vmem:[%s1 + $0x108] sm:$0xff]
  %v81 = vld [vmem:[%s1 + $0x110] sm:$0xff]
  %v82 = vld [vmem:[%s1 + $0x118] sm:$0xff]
  %v83 = vld [vmem:[%s1 + $0x120] sm:$0xff]
  %v84 = vld [vmem:[%s1 + $0x128] sm:$0xff]
  %v85 = vld [vmem:[%s1 + $0x130] sm:$0xff]
  %v86 = vld [vmem:[%s1 + $0x138] sm:$0xff]
  %v87 = vld [vmem:[%s1 + $0x140] sm:$0xff]
  %v88 = vld [vmem:[%s1 + $0x148] sm:$0xff]
  %v89 = vld [vmem:[%s1 + $0x150] sm:$0xff]
  %v90 = vld [vmem:[%s1 + $0x158] sm:$0xff]
  %v91 = vld [vmem:[%s1 + $0x160] sm:$0xff]
  %v92 = vld [vmem:[%s1 + $0x168] sm:$0xff]
  %v93 = vld [vmem:[%s1 + $0x170] sm:$0xff]
  %v94 = vld [vmem:[%s1 + $0x178] sm:$0xff]
  %v95 = vld [vmem:[%s1 + $0x180] sm:$0xff]
  %v96 = vld [vmem:[%s1 + $0x188] sm:$0xff]
  %v97 = vld [vmem:[%s1 + $0x190] sm:$0xff]
  %v98 = vld [vmem:[%s1 + $0x198] sm:$0xff]
  %v99 = vld [vmem:[%s1 + $0x1a0] sm:$0xff]
  %v100 = vld [vmem:[%s1 + $0x1a8] sm:$0xff]
  %v101 = vld [vmem:[%s1 + $0x1b0] sm:$0xff]
  %v102 = vld [vmem:[%s1 + $0x1b8] sm:$0xff]
  %v103 = vld [vmem:[%s1 + $0x1c0] sm:$0xff]
  %v104 = vld [vmem:[%s1 + $0x1c8] sm:$0xff]
  %v105 = vld [vmem:[%s1 + $0x1d0] sm:$0xff]
  %v106 = vld [vmem:[%s1 + $0x1d8] sm:$0xff]
  %v107 = vld [vmem:[%s1 + $0x1e0] sm:$0xff]
  %v108 = vld [vmem:[%s1 + $0x1e8] sm:$0xff]
  %v109 = vld [vmem:[%s1 + $0x1f0] sm:$0xff]
  %v110 = vld [vmem:[%s1 + $0x1f8] sm:$0xff]
  %112 = vst [vmem:[#allocation1] ss:$9 sm:$0xff] %v46
  %v113 = vld [vmem:[#allocation1] sm:$0xff]
  %v114 = vld [vmem:[#allocation1 + $0x9] sm:$0xff]
  %v115 = vld [vmem:[#allocation1 + $0x12] sm:$0xff]
  %v116 = vld [vmem:[#allocation1 + $0x1b] sm:$0xff]
  %v185 = vunpack.c.l.b16 %v47
  %v186 = vunpack.c.h.b16 %v47
  %v187 = vunpack.c.l.b16 %v48
  %v188 = vunpack.c.h.b16 %v48
  %v189 = vunpack.c.l.b16 %v49
  %v190 = vunpack.c.h.b16 %v49
  %v191 = vunpack.c.l.b16 %v50
  %v192 = vunpack.c.h.b16 %v50
  %v193 = vunpack.c.l.b16 %v51
  %v194 = vunpack.c.h.b16 %v51
  %v195 = vunpack.c.l.b16 %v52
  %v196 = vunpack.c.h.b16 %v52
  %v197 = vunpack.c.l.b16 %v53
  %v198 = vunpack.c.h.b16 %v53
  %v199 = vunpack.c.l.b16 %v54
  %v200 = vunpack.c.h.b16 %v54
  %v201 = vunpack.c.l.b16 %v55
  %v202 = vunpack.c.h.b16 %v55
  %v203 = vunpack.c.l.b16 %v56
  %v204 = vunpack.c.h.b16 %v56
  %v205 = vunpack.c.l.b16 %v57
  %v206 = vunpack.c.h.b16 %v57
  %v207 = vunpack.c.l.b16 %v58
  %v208 = vunpack.c.h.b16 %v58
  %v209 = vunpack.c.l.b16 %v59
  %v210 = vunpack.c.h.b16 %v59
  %v211 = vunpack.c.l.b16 %v60
  %v212 = vunpack.c.h.b16 %v60
  %v213 = vunpack.c.l.b16 %v61
  %v214 = vunpack.c.h.b16 %v61
  %v215 = vunpack.c.l.b16 %v62
  %v216 = vunpack.c.h.b16 %v62
  %v217 = vunpack.c.l.b16 %v63
  %v218 = vunpack.c.h.b16 %v63
  %v219 = vunpack.c.l.b16 %v64
  %v220 = vunpack.c.h.b16 %v64
  %v221 = vunpack.c.l.b16 %v65
  %v222 = vunpack.c.h.b16 %v65
  %v223 = vunpack.c.l.b16 %v66
  %v224 = vunpack.c.h.b16 %v66
  %v225 = vunpack.c.l.b16 %v67
  %v226 = vunpack.c.h.b16 %v67
  %v227 = vunpack.c.l.b16 %v68
  %v228 = vunpack.c.h.b16 %v68
  %v229 = vunpack.c.l.b16 %v69
  %v230 = vunpack.c.h.b16 %v69
  %v231 = vunpack.c.l.b16 %v70
  %v232 = vunpack.c.h.b16 %v70
  %v233 = vunpack.c.l.b16 %v71
  %v234 = vunpack.c.h.b16 %v71
  %v235 = vunpack.c.l.b16 %v72
  %v236 = vunpack.c.h.b16 %v72
  %v237 = vunpack.c.l.b16 %v73
  %v238 = vunpack.c.h.b16 %v73
  %v239 = vunpack.c.l.b16 %v74
  %v240 = vunpack.c.h.b16 %v74
  %v241 = vunpack.c.l.b16 %v75
  %v242 = vunpack.c.h.b16 %v75
  %v243 = vunpack.c.l.b16 %v76
  %v244 = vunpack.c.h.b16 %v76
  %v245 = vunpack.c.l.b16 %v77
  %v246 = vunpack.c.h.b16 %v77
  %v247 = vunpack.c.l.b16 %v78
  %v248 = vunpack.c.h.b16 %v78
  %v249 = vunpack.c.l.b16 %v79
  %v250 = vunpack.c.h.b16 %v79
  %v251 = vunpack.c.l.b16 %v80
  %v252 = vunpack.c.h.b16 %v80
  %v253 = vunpack.c.l.b16 %v81
  %v254 = vunpack.c.h.b16 %v81
  %v255 = vunpack.c.l.b16 %v82
  %v256 = vunpack.c.h.b16 %v82
  %v257 = vunpack.c.l.b16 %v83
  %v258 = vunpack.c.h.b16 %v83
  %v259 = vunpack.c.l.b16 %v84
  %v260 = vunpack.c.h.b16 %v84
  %v261 = vunpack.c.l.b16 %v85
  %v262 = vunpack.c.h.b16 %v85
  %v263 = vunpack.c.l.b16 %v86
  %v264 = vunpack.c.h.b16 %v86
  %v265 = vunpack.c.l.b16 %v87
  %v266 = vunpack.c.h.b16 %v87
  %v267 = vunpack.c.l.b16 %v88
  %v268 = vunpack.c.h.b16 %v88
  %v269 = vunpack.c.l.b16 %v89
  %v270 = vunpack.c.h.b16 %v89
  %v271 = vunpack.c.l.b16 %v90
  %v272 = vunpack.c.h.b16 %v90
  %v273 = vunpack.c.l.b16 %v91
  %v274 = vunpack.c.h.b16 %v91
  %v275 = vunpack.c.l.b16 %v92
  %v276 = vunpack.c.h.b16 %v92
  %v277 = vunpack.c.l.b16 %v93
  %v278 = vunpack.c.h.b16 %v93
  %v279 = vunpack.c.l.b16 %v94
  %v280 = vunpack.c.h.b16 %v94
  %v281 = vunpack.c.l.b16 %v95
  %v282 = vunpack.c.h.b16 %v95
  %v283 = vunpack.c.l.b16 %v96
  %v284 = vunpack.c.h.b16 %v96
  %v285 = vunpack.c.l.b16 %v97
  %v286 = vunpack.c.h.b16 %v97
  %v287 = vunpack.c.l.b16 %v98
  %v288 = vunpack.c.h.b16 %v98
  %v289 = vunpack.c.l.b16 %v99
  %v290 = vunpack.c.h.b16 %v99
  %v291 = vunpack.c.l.b16 %v100
  %v292 = vunpack.c.h.b16 %v100
  %v293 = vunpack.c.l.b16 %v101
  %v294 = vunpack.c.h.b16 %v101
  %v295 = vunpack.c.l.b16 %v102
  %v296 = vunpack.c.h.b16 %v102
  %v297 = vunpack.c.l.b16 %v103
  %v298 = vunpack.c.h.b16 %v103
  %v299 = vunpack.c.l.b16 %v104
  %v300 = vunpack.c.h.b16 %v104
  %v301 = vunpack.c.l.b16 %v105
  %v302 = vunpack.c.h.b16 %v105
  %v303 = vunpack.c.l.b16 %v106
  %v304 = vunpack.c.h.b16 %v106
  %v305 = vunpack.c.l.b16 %v107
  %v306 = vunpack.c.h.b16 %v107
  %v307 = vunpack.c.l.b16 %v108
  %v308 = vunpack.c.h.b16 %v108
  %v309 = vunpack.c.l.b16 %v109
  %v310 = vunpack.c.h.b16 %v109
  %v311 = vunpack.c.l.b16 %v110
  %v312 = vunpack.c.h.b16 %v110
  %v313 = vpack.c.b16 %v187, %v185
  %v314 = vpack.c.b16 %v188, %v186
  %v315 = vpack.c.b16 %v191, %v189
  %v316 = vpack.c.b16 %v192, %v190
  %v317 = vpack.c.b16 %v195, %v193
  %v318 = vpack.c.b16 %v196, %v194
  %v319 = vpack.c.b16 %v199, %v197
  %v320 = vpack.c.b16 %v200, %v198
  %v321 = vpack.c.b16 %v203, %v201
  %v322 = vpack.c.b16 %v204, %v202
  %v323 = vpack.c.b16 %v207, %v205
  %v324 = vpack.c.b16 %v208, %v206
  %v325 = vpack.c.b16 %v211, %v209
  %v326 = vpack.c.b16 %v212, %v210
  %v327 = vpack.c.b16 %v215, %v213
  %v328 = vpack.c.b16 %v216, %v214
  %v329 = vpack.c.b16 %v219, %v217
  %v330 = vpack.c.b16 %v220, %v218
  %v331 = vpack.c.b16 %v223, %v221
  %v332 = vpack.c.b16 %v224, %v222
  %v333 = vpack.c.b16 %v227, %v225
  %v334 = vpack.c.b16 %v228, %v226
  %v335 = vpack.c.b16 %v231, %v229
  %v336 = vpack.c.b16 %v232, %v230
  %v337 = vpack.c.b16 %v235, %v233
  %v338 = vpack.c.b16 %v236, %v234
  %v339 = vpack.c.b16 %v239, %v237
  %v340 = vpack.c.b16 %v240, %v238
  %v341 = vpack.c.b16 %v243, %v241
  %v342 = vpack.c.b16 %v244, %v242
  %v343 = vpack.c.b16 %v247, %v245
  %v344 = vpack.c.b16 %v248, %v246
  %v345 = vpack.c.b16 %v251, %v249
  %v346 = vpack.c.b16 %v252, %v250
  %v347 = vpack.c.b16 %v255, %v253
  %v348 = vpack.c.b16 %v256, %v254
  %v349 = vpack.c.b16 %v259, %v257
  %v350 = vpack.c.b16 %v260, %v258
  %v351 = vpack.c.b16 %v263, %v261
  %v352 = vpack.c.b16 %v264, %v262
  %v353 = vpack.c.b16 %v267, %v265
  %v354 = vpack.c.b16 %v268, %v266
  %v355 = vpack.c.b16 %v271, %v269
  %v356 = vpack.c.b16 %v272, %v270
  %v357 = vpack.c.b16 %v275, %v273
  %v358 = vpack.c.b16 %v276, %v274
  %v359 = vpack.c.b16 %v279, %v277
  %v360 = vpack.c.b16 %v280, %v278
  %v361 = vpack.c.b16 %v283, %v281
  %v362 = vpack.c.b16 %v284, %v282
  %v363 = vpack.c.b16 %v287, %v285
  %v364 = vpack.c.b16 %v288, %v286
  %v365 = vpack.c.b16 %v291, %v289
  %v366 = vpack.c.b16 %v292, %v290
  %v367 = vpack.c.b16 %v295, %v293
  %v368 = vpack.c.b16 %v296, %v294
  %v369 = vpack.c.b16 %v299, %v297
  %v370 = vpack.c.b16 %v300, %v298
  %v371 = vpack.c.b16 %v303, %v301
  %v372 = vpack.c.b16 %v304, %v302
  %v373 = vpack.c.b16 %v307, %v305
  %v374 = vpack.c.b16 %v308, %v306
  %v375 = vpack.c.b16 %v311, %v309
  %v376 = vpack.c.b16 %v312, %v310
  %441 = vmatpush.bf16.msra.mxu0 %v327
  %442 = vmatpush.bf16.msra.mxu0 %v325
  %443 = vmatpush.bf16.msra.mxu0 %v323
  %444 = vmatpush.bf16.msra.mxu0 %v321
  %445 = vmatpush.bf16.msra.mxu0 %v319
  %446 = vmatpush.bf16.msra.mxu0 %v317
  %447 = vmatpush.bf16.msra.mxu0 %v315
  %448 = vmatpush.bf16.msra.mxu0 %v313
  %449 = vmatmul.bf16.gmra.mxu0 %v113
  %v450 = vpop.f32.mrf.mxu0
  %v451 = vadd.f32 0.0, %v450
  %v452 = vpop.f32.mrf.mxu0
  %453 = vdwg.mxu0
  %454 = vmatpush.bf16.msra.mxu0 %v343
  %455 = vmatpush.bf16.msra.mxu0 %v341
  %456 = vmatpush.bf16.msra.mxu0 %v339
  %457 = vmatpush.bf16.msra.mxu0 %v337
  %458 = vmatpush.bf16.msra.mxu0 %v335
  %459 = vmatpush.bf16.msra.mxu0 %v333
  %460 = vmatpush.bf16.msra.mxu0 %v331
  %461 = vmatpush.bf16.msra.mxu0 %v329
  %462 = vmatmul.bf16.gmra.mxu0 %v114
  %v463 = vpop.f32.mrf.mxu0
  %v464 = vadd.f32 %v451, %v463
  %v465 = vpop.f32.mrf.mxu0
  %466 = vdwg.mxu0
  %467 = vmatpush.bf16.msra.mxu0 %v359
  %468 = vmatpush.bf16.msra.mxu0 %v357
  %469 = vmatpush.bf16.msra.mxu0 %v355
  %470 = vmatpush.bf16.msra.mxu0 %v353
  %471 = vmatpush.bf16.msra.mxu0 %v351
  %472 = vmatpush.bf16.msra.mxu0 %v349
  %473 = vmatpush.bf16.msra.mxu0 %v347
  %474 = vmatpush.bf16.msra.mxu0 %v345
  %475 = vmatmul.bf16.gmra.mxu0 %v115
  %v476 = vpop.f32.mrf.mxu0
  %v477 = vadd.f32 %v464, %v476
  %v478 = vpop.f32.mrf.mxu0
  %479 = vdwg.mxu0
  %480 = vmatpush.bf16.msra.mxu0 %v375
  %481 = vmatpush.bf16.msra.mxu0 %v373
  %482 = vmatpush.bf16.msra.mxu0 %v371
  %483 = vmatpush.bf16.msra.mxu0 %v369
  %484 = vmatpush.bf16.msra.mxu0 %v367
  %485 = vmatpush.bf16.msra.mxu0 %v365
  %486 = vmatpush.bf16.msra.mxu0 %v363
  %487 = vmatpush.bf16.msra.mxu0 %v361
  %488 = vmatmul.bf16.gmra.mxu0 %v116
  %v489 = vpop.f32.mrf.mxu0
  %v490 = vadd.f32 %v477, %v489
  %v491 = vpop.f32.mrf.mxu0
  %492 = vdwg.mxu0
  %493 = vmatpush.bf16.msra.mxu0 %v328
  %494 = vmatpush.bf16.msra.mxu0 %v326
  %495 = vmatpush.bf16.msra.mxu0 %v324
  %496 = vmatpush.bf16.msra.mxu0 %v322
  %497 = vmatpush.bf16.msra.mxu0 %v320
  %498 = vmatpush.bf16.msra.mxu0 %v318
  %499 = vmatpush.bf16.msra.mxu0 %v316
  %500 = vmatpush.bf16.msra.mxu0 %v314
  %501 = vmatmul.bf16.gmra.mxu0 %v113
  %v502 = vpop.f32.mrf.mxu0
  %v503 = vadd.f32 0.0, %v502
  %v504 = vpop.f32.mrf.mxu0
  %505 = vdwg.mxu0
  %506 = vmatpush.bf16.msra.mxu0 %v344
  %507 = vmatpush.bf16.msra.mxu0 %v342
  %508 = vmatpush.bf16.msra.mxu0 %v340
  %509 = vmatpush.bf16.msra.mxu0 %v338
  %510 = vmatpush.bf16.msra.mxu0 %v336
  %511 = vmatpush.bf16.msra.mxu0 %v334
  %512 = vmatpush.bf16.msra.mxu0 %v332
  %513 = vmatpush.bf16.msra.mxu0 %v330
  %514 = vmatmul.bf16.gmra.mxu0 %v114
  %v515 = vpop.f32.mrf.mxu0
  %v516 = vadd.f32 %v503, %v515
  %v517 = vpop.f32.mrf.mxu0
  %518 = vdwg.mxu0
  %519 = vmatpush.bf16.msra.mxu0 %v360
  %520 = vmatpush.bf16.msra.mxu0 %v358
  %521 = vmatpush.bf16.msra.mxu0 %v356
  %522 = vmatpush.bf16.msra.mxu0 %v354
  %523 = vmatpush.bf16.msra.mxu0 %v352
  %524 = vmatpush.bf16.msra.mxu0 %v350
  %525 = vmatpush.bf16.msra.mxu0 %v348
  %526 = vmatpush.bf16.msra.mxu0 %v346
  %527 = vmatmul.bf16.gmra.mxu0 %v115
  %v528 = vpop.f32.mrf.mxu0
  %v529 = vadd.f32 %v516, %v528
  %v530 = vpop.f32.mrf.mxu0
  %531 = vdwg.mxu0
  %532 = vmatpush.bf16.msra.mxu0 %v376
  %533 = vmatpush.bf16.msra.mxu0 %v374
  %534 = vmatpush.bf16.msra.mxu0 %v372
  %535 = vmatpush.bf16.msra.mxu0 %v370
  %536 = vmatpush.bf16.msra.mxu0 %v368
  %537 = vmatpush.bf16.msra.mxu0 %v366
  %538 = vmatpush.bf16.msra.mxu0 %v364
  %539 = vmatpush.bf16.msra.mxu0 %v362
  %540 = vmatmul.bf16.gmra.mxu0 %v116
  %v541 = vpop.f32.mrf.mxu0
  %v542 = vadd.f32 %v529, %v541
  %v543 = vpop.f32.mrf.mxu0
  %544 = vdwg.mxu0
  %vm545 = vcmask 1041408
  %v546 = vsel %vm545, %v490, 0.0
  %v547 = vrot.slane %v546, 4
  %v548 = vadd.f32 %v546, %v547
  %v549 = vrot.slane %v548, 2
  %v550 = vadd.f32 %v548, %v549
  %v551 = vrot.slane %v550, 1
  %v552 = vadd.f32 %v550, %v551
  %v553 = vsel %vm545, %v542, 0.0
  %v554 = vrot.slane %v553, 4
  %v555 = vadd.f32 %v553, %v554
  %v556 = vrot.slane %v555, 2
  %v557 = vadd.f32 %v555, %v556
  %v558 = vrot.slane %v557, 1
  %v559 = vadd.f32 %v557, %v558
  %v560 = vld [vmem:[%s2] sm:$0xff]
  %v561 = vld [vmem:[%s2 + $0x8] sm:$0xff]
  %v562 = vld [vmem:[%s2 + $0x10] sm:$0xff]
  %v563 = vld [vmem:[%s2 + $0x18] sm:$0xff]
  %v564 = vld [vmem:[%s2 + $0x20] sm:$0xff]
  %v565 = vld [vmem:[%s2 + $0x28] sm:$0xff]
  %v566 = vld [vmem:[%s2 + $0x30] sm:$0xff]
  %v567 = vld [vmem:[%s2 + $0x38] sm:$0xff]
  %v568 = vld [vmem:[%s2 + $0x40] sm:$0xff]
  %v569 = vld [vmem:[%s2 + $0x48] sm:$0xff]
  %v570 = vld [vmem:[%s2 + $0x50] sm:$0xff]
  %v571 = vld [vmem:[%s2 + $0x58] sm:$0xff]
  %v572 = vld [vmem:[%s2 + $0x60] sm:$0xff]
  %v573 = vld [vmem:[%s2 + $0x68] sm:$0xff]
  %v574 = vld [vmem:[%s2 + $0x70] sm:$0xff]
  %v575 = vld [vmem:[%s2 + $0x78] sm:$0xff]
  %v576 = vld [vmem:[%s2 + $0x80] sm:$0xff]
  %v577 = vld [vmem:[%s2 + $0x88] sm:$0xff]
  %v578 = vld [vmem:[%s2 + $0x90] sm:$0xff]
  %v579 = vld [vmem:[%s2 + $0x98] sm:$0xff]
  %v580 = vld [vmem:[%s2 + $0xa0] sm:$0xff]
  %v581 = vld [vmem:[%s2 + $0xa8] sm:$0xff]
  %v582 = vld [vmem:[%s2 + $0xb0] sm:$0xff]
  %v583 = vld [vmem:[%s2 + $0xb8] sm:$0xff]
  %v584 = vld [vmem:[%s2 + $0xc0] sm:$0xff]
  %v585 = vld [vmem:[%s2 + $0xc8] sm:$0xff]
  %v586 = vld [vmem:[%s2 + $0xd0] sm:$0xff]
  %v587 = vld [vmem:[%s2 + $0xd8] sm:$0xff]
  %v588 = vld [vmem:[%s2 + $0xe0] sm:$0xff]
  %v589 = vld [vmem:[%s2 + $0xe8] sm:$0xff]
  %v590 = vld [vmem:[%s2 + $0xf0] sm:$0xff]
  %v591 = vld [vmem:[%s2 + $0xf8] sm:$0xff]
  %592 = vmatpush.msra.mxu0 %v575
  %593 = vmatpush.msra.mxu0 %v574
  %594 = vmatpush.msra.mxu0 %v573
  %595 = vmatpush.msra.mxu0 %v572
  %596 = vmatpush.msra.mxu0 %v571
  %597 = vmatpush.msra.mxu0 %v570
  %598 = vmatpush.msra.mxu0 %v569
  %599 = vmatpush.msra.mxu0 %v568
  %600 = vmatpush.msra.mxu0 %v567
  %601 = vmatpush.msra.mxu0 %v566
  %602 = vmatpush.msra.mxu0 %v565
  %603 = vmatpush.msra.mxu0 %v564
  %604 = vmatpush.msra.mxu0 %v563
  %605 = vmatpush.msra.mxu0 %v562
  %606 = vmatpush.msra.mxu0 %v561
  %607 = vmatpush.msra.mxu0 %v560
  %608 = vmatmul.f32.gmra.mxu0 %v552
  %v609 = vpop.f32.mrf.mxu0
  %v610 = vadd.f32 0.0, %v609
  %611 = vdwg.mxu0
  %612 = vmatpush.msra.mxu0 %v591
  %613 = vmatpush.msra.mxu0 %v590
  %614 = vmatpush.msra.mxu0 %v589
  %615 = vmatpush.msra.mxu0 %v588
  %616 = vmatpush.msra.mxu0 %v587
  %617 = vmatpush.msra.mxu0 %v586
  %618 = vmatpush.msra.mxu0 %v585
  %619 = vmatpush.msra.mxu0 %v584
  %620 = vmatpush.msra.mxu0 %v583
  %621 = vmatpush.msra.mxu0 %v582
  %622 = vmatpush.msra.mxu0 %v581
  %623 = vmatpush.msra.mxu0 %v580
  %624 = vmatpush.msra.mxu0 %v579
  %625 = vmatpush.msra.mxu0 %v578
  %626 = vmatpush.msra.mxu0 %v577
  %627 = vmatpush.msra.mxu0 %v576
  %628 = vmatmul.f32.gmra.mxu0 %v559
  %v629 = vpop.f32.mrf.mxu0
  %v630 = vadd.f32 %v610, %v629
  %631 = vdwg.mxu0
  %v632 = vrcp.pop 32.0
  %v633 = vmul.f32 32.0, %v632
  %v634 = vsub.f32 1.0, %v633
  %v635 = vmul.f32 %v632, %v634
  %v636 = vadd.f32 %v632, %v635
  %vm637 = vweird.f32 %v632
  %v638 = vsel %vm637, %v632, %v636
  %v639 = vmul.f32 %v630, %v638
  %v640 = vld [vmem:[%s3] sm:$0xff]
  %v641 = vld [vmem:[%s3 + $0x8] sm:$0xff]
  %v642 = vld [vmem:[%s3 + $0x10] sm:$0xff]
  %v643 = vld [vmem:[%s3 + $0x18] sm:$0xff]
  %vm644 = vcmask 130048
  %v646 = vsel %vm644, %v639, 0
  %648 = vmatpush.msra.mxu0 0.0
  %649 = vmatpush.msra.mxu0 0.0
  %650 = vmatpush.msra.mxu0 0.0
  %651 = vmatpush.msra.mxu0 0.0
  %652 = vmatpush.msra.mxu0 0.0
  %653 = vmatpush.msra.mxu0 0.0
  %654 = vmatpush.msra.mxu0 0.0
  %655 = vmatpush.msra.mxu0 0.0
  %656 = vmatpush.msra.mxu0 0.0
  %657 = vmatpush.msra.mxu0 0.0
  %658 = vmatpush.msra.mxu0 0.0
  %659 = vmatpush.msra.mxu0 0.0
  %660 = vmatpush.msra.mxu0 0.0
  %661 = vmatpush.msra.mxu0 0.0
  %662 = vmatpush.msra.mxu0 %v642
  %663 = vmatpush.msra.mxu0 %v640
  %664 = vmatmul.f32.gmra.mxu0 %v646
  %v665 = vpop.f32.mrf.mxu0
  %v666 = vadd.f32 0.0, %v665
  %667 = vdwg.mxu0
  %668 = vmatpush.msra.mxu0 0.0
  %669 = vmatpush.msra.mxu0 0.0
  %670 = vmatpush.msra.mxu0 0.0
  %671 = vmatpush.msra.mxu0 0.0
  %672 = vmatpush.msra.mxu0 0.0
  %673 = vmatpush.msra.mxu0 0.0
  %674 = vmatpush.msra.mxu0 0.0
  %675 = vmatpush.msra.mxu0 0.0
  %676 = vmatpush.msra.mxu0 0.0
  %677 = vmatpush.msra.mxu0 0.0
  %678 = vmatpush.msra.mxu0 0.0
  %679 = vmatpush.msra.mxu0 0.0
  %680 = vmatpush.msra.mxu0 0.0
  %681 = vmatpush.msra.mxu0 0.0
  %682 = vmatpush.msra.mxu0 %v643
  %683 = vmatpush.msra.mxu0 %v641
  %684 = vmatmul.f32.gmra.mxu0 %v646
  %v685 = vpop.f32.mrf.mxu0
  %v686 = vadd.f32 0.0, %v685
  %687 = vdwg.mxu0
  %v688 = vperm.slane %v666, 0
  %v689 = vperm.slane %v686, 0
  %v690 = vsub.f32 %v490, %v688
  %v691 = vsub.f32 %v542, %v689
  %v692 = vmul.f32 %v690, %v690
  %v693 = vmul.f32 %v691, %v691
  %v694 = vsel %vm545, %v692, 0.0
  %v695 = vrot.slane %v694, 4
  %v696 = vadd.f32 %v694, %v695
  %v697 = vrot.slane %v696, 2
  %v698 = vadd.f32 %v696, %v697
  %v699 = vrot.slane %v698, 1
  %v700 = vadd.f32 %v698, %v699
  %v701 = vsel %vm545, %v693, 0.0
  %v702 = vrot.slane %v701, 4
  %v703 = vadd.f32 %v701, %v702
  %v704 = vrot.slane %v703, 2
  %v705 = vadd.f32 %v703, %v704
  %v706 = vrot.slane %v705, 1
  %v707 = vadd.f32 %v705, %v706
  %708 = vmatpush.msra.mxu0 %v575
  %709 = vmatpush.msra.mxu0 %v574
  %710 = vmatpush.msra.mxu0 %v573
  %711 = vmatpush.msra.mxu0 %v572
  %712 = vmatpush.msra.mxu0 %v571
  %713 = vmatpush.msra.mxu0 %v570
  %714 = vmatpush.msra.mxu0 %v569
  %715 = vmatpush.msra.mxu0 %v568
  %716 = vmatpush.msra.mxu0 %v567
  %717 = vmatpush.msra.mxu0 %v566
  %718 = vmatpush.msra.mxu0 %v565
  %719 = vmatpush.msra.mxu0 %v564
  %720 = vmatpush.msra.mxu0 %v563
  %721 = vmatpush.msra.mxu0 %v562
  %722 = vmatpush.msra.mxu0 %v561
  %723 = vmatpush.msra.mxu0 %v560
  %724 = vmatmul.f32.gmra.mxu0 %v700
  %v725 = vpop.f32.mrf.mxu0
  %v726 = vadd.f32 0.0, %v725
  %727 = vdwg.mxu0
  %728 = vmatpush.msra.mxu0 %v591
  %729 = vmatpush.msra.mxu0 %v590
  %730 = vmatpush.msra.mxu0 %v589
  %731 = vmatpush.msra.mxu0 %v588
  %732 = vmatpush.msra.mxu0 %v587
  %733 = vmatpush.msra.mxu0 %v586
  %734 = vmatpush.msra.mxu0 %v585
  %735 = vmatpush.msra.mxu0 %v584
  %736 = vmatpush.msra.mxu0 %v583
  %737 = vmatpush.msra.mxu0 %v582
  %738 = vmatpush.msra.mxu0 %v581
  %739 = vmatpush.msra.mxu0 %v580
  %740 = vmatpush.msra.mxu0 %v579
  %741 = vmatpush.msra.mxu0 %v578
  %742 = vmatpush.msra.mxu0 %v577
  %743 = vmatpush.msra.mxu0 %v576
  %744 = vmatmul.f32.gmra.mxu0 %v707
  %v745 = vpop.f32.mrf.mxu0
  %v746 = vadd.f32 %v726, %v745
  %747 = vdwg.mxu0
  %v748 = vmul.f32 %v746, %v638
  %v749 = vld [vmem:[%s4] sm:$0x1]
  %v750 = vadd.f32 %v748, 1e-05
  %v751 = vrsqrt.pop %v750
  %v752 = vmul.f32 %v751, %v750
  %v753 = vmul.f32 %v752, %v751
  %v754 = vmul.f32 0.5, %v753
  %v755 = vsub.f32 1.5, %v754
  %v756 = vmul.f32 %v751, %v755
  %vm757 = vweird.f32 %v750
  %vm758 = vweird.f32 %v751
  %vm759 = vmor %vm757, %vm758
  %v760 = vsel %vm759, %v751, %v756
  %v761 = vmul.f32 %v749, %v760
  %v763 = vsel %vm644, %v761, 0
  %765 = vmatpush.msra.mxu0 0.0
  %766 = vmatpush.msra.mxu0 0.0
  %767 = vmatpush.msra.mxu0 0.0
  %768 = vmatpush.msra.mxu0 0.0
  %769 = vmatpush.msra.mxu0 0.0
  %770 = vmatpush.msra.mxu0 0.0
  %771 = vmatpush.msra.mxu0 0.0
  %772 = vmatpush.msra.mxu0 0.0
  %773 = vmatpush.msra.mxu0 0.0
  %774 = vmatpush.msra.mxu0 0.0
  %775 = vmatpush.msra.mxu0 0.0
  %776 = vmatpush.msra.mxu0 0.0
  %777 = vmatpush.msra.mxu0 0.0
  %778 = vmatpush.msra.mxu0 0.0
  %779 = vmatpush.msra.mxu0 %v642
  %780 = vmatpush.msra.mxu0 %v640
  %781 = vmatmul.f32.gmra.mxu0 %v763
  %v782 = vpop.f32.mrf.mxu0
  %v783 = vadd.f32 0.0, %v782
  %784 = vdwg.mxu0
  %785 = vmatpush.msra.mxu0 0.0
  %786 = vmatpush.msra.mxu0 0.0
  %787 = vmatpush.msra.mxu0 0.0
  %788 = vmatpush.msra.mxu0 0.0
  %789 = vmatpush.msra.mxu0 0.0
  %790 = vmatpush.msra.mxu0 0.0
  %791 = vmatpush.msra.mxu0 0.0
  %792 = vmatpush.msra.mxu0 0.0
  %793 = vmatpush.msra.mxu0 0.0
  %794 = vmatpush.msra.mxu0 0.0
  %795 = vmatpush.msra.mxu0 0.0
  %796 = vmatpush.msra.mxu0 0.0
  %797 = vmatpush.msra.mxu0 0.0
  %798 = vmatpush.msra.mxu0 0.0
  %799 = vmatpush.msra.mxu0 %v643
  %800 = vmatpush.msra.mxu0 %v641
  %801 = vmatmul.f32.gmra.mxu0 %v763
  %v802 = vpop.f32.mrf.mxu0
  %v803 = vadd.f32 0.0, %v802
  %804 = vdwg.mxu0
  %v805 = vperm.slane %v783, 0
  %v806 = vperm.slane %v803, 0
  %v807 = vmul.f32 %v690, %v805
  %v808 = vmul.f32 %v691, %v806
  %v809 = vld [vmem:[%s5] sm:$0x1]
  %v811 = vsel %vm644, %v809, 0
  %813 = vmatpush.msra.mxu0 0.0
  %814 = vmatpush.msra.mxu0 0.0
  %815 = vmatpush.msra.mxu0 0.0
  %816 = vmatpush.msra.mxu0 0.0
  %817 = vmatpush.msra.mxu0 0.0
  %818 = vmatpush.msra.mxu0 0.0
  %819 = vmatpush.msra.mxu0 0.0
  %820 = vmatpush.msra.mxu0 0.0
  %821 = vmatpush.msra.mxu0 0.0
  %822 = vmatpush.msra.mxu0 0.0
  %823 = vmatpush.msra.mxu0 0.0
  %824 = vmatpush.msra.mxu0 0.0
  %825 = vmatpush.msra.mxu0 0.0
  %826 = vmatpush.msra.mxu0 0.0
  %827 = vmatpush.msra.mxu0 %v642
  %828 = vmatpush.msra.mxu0 %v640
  %829 = vmatmul.f32.gmra.mxu0 %v811
  %v830 = vpop.f32.mrf.mxu0
  %v831 = vadd.f32 0.0, %v830
  %832 = vdwg.mxu0
  %833 = vmatpush.msra.mxu0 0.0
  %834 = vmatpush.msra.mxu0 0.0
  %835 = vmatpush.msra.mxu0 0.0
  %836 = vmatpush.msra.mxu0 0.0
  %837 = vmatpush.msra.mxu0 0.0
  %838 = vmatpush.msra.mxu0 0.0
  %839 = vmatpush.msra.mxu0 0.0
  %840 = vmatpush.msra.mxu0 0.0
  %841 = vmatpush.msra.mxu0 0.0
  %842 = vmatpush.msra.mxu0 0.0
  %843 = vmatpush.msra.mxu0 0.0
  %844 = vmatpush.msra.mxu0 0.0
  %845 = vmatpush.msra.mxu0 0.0
  %846 = vmatpush.msra.mxu0 0.0
  %847 = vmatpush.msra.mxu0 %v643
  %848 = vmatpush.msra.mxu0 %v641
  %849 = vmatmul.f32.gmra.mxu0 %v811
  %v850 = vpop.f32.mrf.mxu0
  %v851 = vadd.f32 0.0, %v850
  %852 = vdwg.mxu0
  %v853 = vperm.slane %v831, 0
  %v854 = vperm.slane %v851, 0
  %v855 = vadd.f32 %v807, %v853
  %v856 = vadd.f32 %v808, %v854
  %vm857 = vcmp.ge.f32.partialorder %v855, 0.0
  %vm858 = vcmp.ge.f32.partialorder %v856, 0.0
  %v859 = vmul.f32 %v855, 0.2
  %v860 = vmul.f32 %v856, 0.2
  %v861 = vsel %vm857, %v855, %v859
  %v862 = vsel %vm858, %v856, %v860
  %v863 = vpack.c.bf16 %v861, %v861
  %v864 = vpack.c.bf16 %v862, %v862
  %v865 = vld [vmem:[%s6] sm:$0xf]
  %v866 = vld [vmem:[%s6 + $0x4] sm:$0xf]
  %v867 = vld [vmem:[%s6 + $0x8] sm:$0xf]
  %v868 = vld [vmem:[%s6 + $0xc] sm:$0xf]
  %v869 = vld [vmem:[%s6 + $0x10] sm:$0xf]
  %v870 = vld [vmem:[%s6 + $0x14] sm:$0xf]
  %v871 = vld [vmem:[%s6 + $0x18] sm:$0xf]
  %v872 = vld [vmem:[%s6 + $0x1c] sm:$0xf]
  %v873 = vld [vmem:[%s6 + $0x20] sm:$0xf]
  %v874 = vld [vmem:[%s6 + $0x24] sm:$0xf]
  %v875 = vld [vmem:[%s6 + $0x28] sm:$0xf]
  %v876 = vld [vmem:[%s6 + $0x2c] sm:$0xf]
  %v877 = vld [vmem:[%s6 + $0x30] sm:$0xf]
  %v878 = vld [vmem:[%s6 + $0x34] sm:$0xf]
  %v879 = vld [vmem:[%s6 + $0x38] sm:$0xf]
  %v880 = vld [vmem:[%s6 + $0x3c] sm:$0xf]
  %v881 = vld [vmem:[%s6 + $0x40] sm:$0xf]
  %v882 = vld [vmem:[%s6 + $0x44] sm:$0xf]
  %v883 = vld [vmem:[%s6 + $0x48] sm:$0xf]
  %v884 = vld [vmem:[%s6 + $0x4c] sm:$0xf]
  %v885 = vld [vmem:[%s6 + $0x50] sm:$0xf]
  %v886 = vld [vmem:[%s6 + $0x54] sm:$0xf]
  %v887 = vld [vmem:[%s6 + $0x58] sm:$0xf]
  %v888 = vld [vmem:[%s6 + $0x5c] sm:$0xf]
  %v889 = vld [vmem:[%s6 + $0x60] sm:$0xf]
  %v890 = vld [vmem:[%s6 + $0x64] sm:$0xf]
  %v891 = vld [vmem:[%s6 + $0x68] sm:$0xf]
  %v892 = vld [vmem:[%s6 + $0x6c] sm:$0xf]
  %v893 = vld [vmem:[%s6 + $0x70] sm:$0xf]
  %v894 = vld [vmem:[%s6 + $0x74] sm:$0xf]
  %v895 = vld [vmem:[%s6 + $0x78] sm:$0xf]
  %v896 = vld [vmem:[%s6 + $0x7c] sm:$0xf]
  %v929 = vunpack.c.l.b16 %v865
  %v930 = vunpack.c.l.b16 %v866
  %v931 = vunpack.c.l.b16 %v867
  %v932 = vunpack.c.l.b16 %v868
  %v933 = vunpack.c.l.b16 %v869
  %v934 = vunpack.c.l.b16 %v870
  %v935 = vunpack.c.l.b16 %v871
  %v936 = vunpack.c.l.b16 %v872
  %v937 = vunpack.c.l.b16 %v873
  %v938 = vunpack.c.l.b16 %v874
  %v939 = vunpack.c.l.b16 %v875
  %v940 = vunpack.c.l.b16 %v876
  %v941 = vunpack.c.l.b16 %v877
  %v942 = vunpack.c.l.b16 %v878
  %v943 = vunpack.c.l.b16 %v879
  %v944 = vunpack.c.l.b16 %v880
  %v945 = vunpack.c.l.b16 %v881
  %v946 = vunpack.c.l.b16 %v882
  %v947 = vunpack.c.l.b16 %v883
  %v948 = vunpack.c.l.b16 %v884
  %v949 = vunpack.c.l.b16 %v885
  %v950 = vunpack.c.l.b16 %v886
  %v951 = vunpack.c.l.b16 %v887
  %v952 = vunpack.c.l.b16 %v888
  %v953 = vunpack.c.l.b16 %v889
  %v954 = vunpack.c.l.b16 %v890
  %v955 = vunpack.c.l.b16 %v891
  %v956 = vunpack.c.l.b16 %v892
  %v957 = vunpack.c.l.b16 %v893
  %v958 = vunpack.c.l.b16 %v894
  %v959 = vunpack.c.l.b16 %v895
  %v960 = vunpack.c.l.b16 %v896
  %v961 = vpack.c.b16 %v930, %v929
  %v962 = vpack.c.b16 %v932, %v931
  %v963 = vpack.c.b16 %v934, %v933
  %v964 = vpack.c.b16 %v936, %v935
  %v965 = vpack.c.b16 %v938, %v937
  %v966 = vpack.c.b16 %v940, %v939
  %v967 = vpack.c.b16 %v942, %v941
  %v968 = vpack.c.b16 %v944, %v943
  %v969 = vpack.c.b16 %v946, %v945
  %v970 = vpack.c.b16 %v948, %v947
  %v971 = vpack.c.b16 %v950, %v949
  %v972 = vpack.c.b16 %v952, %v951
  %v973 = vpack.c.b16 %v954, %v953
  %v974 = vpack.c.b16 %v956, %v955
  %v975 = vpack.c.b16 %v958, %v957
  %v976 = vpack.c.b16 %v960, %v959
  %993 = vmatpush.bf16.msra.mxu0 %v968
  %994 = vmatpush.bf16.msra.mxu0 %v967
  %995 = vmatpush.bf16.msra.mxu0 %v966
  %996 = vmatpush.bf16.msra.mxu0 %v965
  %997 = vmatpush.bf16.msra.mxu0 %v964
  %998 = vmatpush.bf16.msra.mxu0 %v963
  %999 = vmatpush.bf16.msra.mxu0 %v962
  %1000 = vmatpush.bf16.msra.mxu0 %v961
  %1001 = vmatmul.bf16.gmra.mxu0 %v863
  %v1002 = vpop.f32.mrf.mxu0
  %v1003 = vadd.f32 0.0, %v1002
  %v1004 = vpop.f32.mrf.mxu0
  %1005 = vdwg.mxu0
  %1006 = vmatpush.bf16.msra.mxu0 %v976
  %1007 = vmatpush.bf16.msra.mxu0 %v975
  %1008 = vmatpush.bf16.msra.mxu0 %v974
  %1009 = vmatpush.bf16.msra.mxu0 %v973
  %1010 = vmatpush.bf16.msra.mxu0 %v972
  %1011 = vmatpush.bf16.msra.mxu0 %v971
  %1012 = vmatpush.bf16.msra.mxu0 %v970
  %1013 = vmatpush.bf16.msra.mxu0 %v969
  %1014 = vmatmul.bf16.gmra.mxu0 %v864
  %v1015 = vpop.f32.mrf.mxu0
  %v1016 = vadd.f32 %v1003, %v1015
  %v1017 = vpop.f32.mrf.mxu0
  %1018 = vdwg.mxu0
  %v1019 = vsel %vm545, %v1016, 0.0
  %v1020 = vrot.slane %v1019, 4
  %v1021 = vadd.f32 %v1019, %v1020
  %v1022 = vrot.slane %v1021, 2
  %v1023 = vadd.f32 %v1021, %v1022
  %v1024 = vrot.slane %v1023, 1
  %v1025 = vadd.f32 %v1023, %v1024
  %v1026 = vld [vmem:[%s7] sm:$0xff]
  %v1027 = vld [vmem:[%s7 + $0x8] sm:$0xff]
  %v1028 = vld [vmem:[%s7 + $0x10] sm:$0xff]
  %v1029 = vld [vmem:[%s7 + $0x18] sm:$0xff]
  %v1030 = vld [vmem:[%s7 + $0x20] sm:$0xff]
  %v1031 = vld [vmem:[%s7 + $0x28] sm:$0xff]
  %v1032 = vld [vmem:[%s7 + $0x30] sm:$0xff]
  %v1033 = vld [vmem:[%s7 + $0x38] sm:$0xff]
  %v1034 = vld [vmem:[%s7 + $0x40] sm:$0xff]
  %v1035 = vld [vmem:[%s7 + $0x48] sm:$0xff]
  %v1036 = vld [vmem:[%s7 + $0x50] sm:$0xff]
  %v1037 = vld [vmem:[%s7 + $0x58] sm:$0xff]
  %v1038 = vld [vmem:[%s7 + $0x60] sm:$0xff]
  %v1039 = vld [vmem:[%s7 + $0x68] sm:$0xff]
  %v1040 = vld [vmem:[%s7 + $0x70] sm:$0xff]
  %v1041 = vld [vmem:[%s7 + $0x78] sm:$0xff]
  %1042 = vmatpush.msra.mxu0 %v1041
  %1043 = vmatpush.msra.mxu0 %v1040
  %1044 = vmatpush.msra.mxu0 %v1039
  %1045 = vmatpush.msra.mxu0 %v1038
  %1046 = vmatpush.msra.mxu0 %v1037
  %1047 = vmatpush.msra.mxu0 %v1036
  %1048 = vmatpush.msra.mxu0 %v1035
  %1049 = vmatpush.msra.mxu0 %v1034
  %1050 = vmatpush.msra.mxu0 %v1033
  %1051 = vmatpush.msra.mxu0 %v1032
  %1052 = vmatpush.msra.mxu0 %v1031
  %1053 = vmatpush.msra.mxu0 %v1030
  %1054 = vmatpush.msra.mxu0 %v1029
  %1055 = vmatpush.msra.mxu0 %v1028
  %1056 = vmatpush.msra.mxu0 %v1027
  %1057 = vmatpush.msra.mxu0 %v1026
  %1058 = vmatmul.f32.gmra.mxu0 %v1025
  %v1059 = vpop.f32.mrf.mxu0
  %v1060 = vadd.f32 0.0, %v1059
  %1061 = vdwg.mxu0
  %v1062 = vrcp.pop 8.0
  %v1063 = vmul.f32 8.0, %v1062
  %v1064 = vsub.f32 1.0, %v1063
  %v1065 = vmul.f32 %v1062, %v1064
  %v1066 = vadd.f32 %v1062, %v1065
  %vm1067 = vweird.f32 %v1062
  %v1068 = vsel %vm1067, %v1062, %v1066
  %v1069 = vmul.f32 %v1060, %v1068
  %v1070 = vld [vmem:[%s8] sm:$0xff]
  %v1071 = vld [vmem:[%s8 + $0x8] sm:$0xff]
  %v1072 = vld [vmem:[%s8 + $0x10] sm:$0xff]
  %v1073 = vld [vmem:[%s8 + $0x18] sm:$0xff]
  %vm1074 = vcmask 261120
  %v1076 = vsel %vm1074, %v1069, 0
  %1078 = vmatpush.msra.mxu0 0.0
  %1079 = vmatpush.msra.mxu0 0.0
  %1080 = vmatpush.msra.mxu0 0.0
  %1081 = vmatpush.msra.mxu0 0.0
  %1082 = vmatpush.msra.mxu0 0.0
  %1083 = vmatpush.msra.mxu0 0.0
  %1084 = vmatpush.msra.mxu0 0.0
  %1085 = vmatpush.msra.mxu0 0.0
  %1086 = vmatpush.msra.mxu0 0.0
  %1087 = vmatpush.msra.mxu0 0.0
  %1088 = vmatpush.msra.mxu0 0.0
  %1089 = vmatpush.msra.mxu0 0.0
  %1090 = vmatpush.msra.mxu0 %v1073
  %1091 = vmatpush.msra.mxu0 %v1072
  %1092 = vmatpush.msra.mxu0 %v1071
  %1093 = vmatpush.msra.mxu0 %v1070
  %1094 = vmatmul.f32.gmra.mxu0 %v1076
  %v1095 = vpop.f32.mrf.mxu0
  %v1096 = vadd.f32 0.0, %v1095
  %1097 = vdwg.mxu0
  %v1098 = vperm.slane %v1096, 0
  %v1099 = vsub.f32 %v1016, %v1098
  %v1100 = vmul.f32 %v1099, %v1099
  %v1101 = vsel %vm545, %v1100, 0.0
  %v1102 = vrot.slane %v1101, 4
  %v1103 = vadd.f32 %v1101, %v1102
  %v1104 = vrot.slane %v1103, 2
  %v1105 = vadd.f32 %v1103, %v1104
  %v1106 = vrot.slane %v1105, 1
  %v1107 = vadd.f32 %v1105, %v1106
  %1108 = vmatpush.msra.mxu0 %v1041
  %1109 = vmatpush.msra.mxu0 %v1040
  %1110 = vmatpush.msra.mxu0 %v1039
  %1111 = vmatpush.msra.mxu0 %v1038
  %1112 = vmatpush.msra.mxu0 %v1037
  %1113 = vmatpush.msra.mxu0 %v1036
  %1114 = vmatpush.msra.mxu0 %v1035
  %1115 = vmatpush.msra.mxu0 %v1034
  %1116 = vmatpush.msra.mxu0 %v1033
  %1117 = vmatpush.msra.mxu0 %v1032
  %1118 = vmatpush.msra.mxu0 %v1031
  %1119 = vmatpush.msra.mxu0 %v1030
  %1120 = vmatpush.msra.mxu0 %v1029
  %1121 = vmatpush.msra.mxu0 %v1028
  %1122 = vmatpush.msra.mxu0 %v1027
  %1123 = vmatpush.msra.mxu0 %v1026
  %1124 = vmatmul.f32.gmra.mxu0 %v1107
  %v1125 = vpop.f32.mrf.mxu0
  %v1126 = vadd.f32 0.0, %v1125
  %1127 = vdwg.mxu0
  %v1128 = vmul.f32 %v1126, %v1068
  %v1129 = vld [vmem:[%s9] sm:$0x1]
  %v1130 = vadd.f32 %v1128, 1e-05
  %v1131 = vrsqrt.pop %v1130
  %v1132 = vmul.f32 %v1131, %v1130
  %v1133 = vmul.f32 %v1132, %v1131
  %v1134 = vmul.f32 0.5, %v1133
  %v1135 = vsub.f32 1.5, %v1134
  %v1136 = vmul.f32 %v1131, %v1135
  %vm1137 = vweird.f32 %v1130
  %vm1138 = vweird.f32 %v1131
  %vm1139 = vmor %vm1137, %vm1138
  %v1140 = vsel %vm1139, %v1131, %v1136
  %v1141 = vmul.f32 %v1129, %v1140
  %v1143 = vsel %vm1074, %v1141, 0
  %1145 = vmatpush.msra.mxu0 0.0
  %1146 = vmatpush.msra.mxu0 0.0
  %1147 = vmatpush.msra.mxu0 0.0
  %1148 = vmatpush.msra.mxu0 0.0
  %1149 = vmatpush.msra.mxu0 0.0
  %1150 = vmatpush.msra.mxu0 0.0
  %1151 = vmatpush.msra.mxu0 0.0
  %1152 = vmatpush.msra.mxu0 0.0
  %1153 = vmatpush.msra.mxu0 0.0
  %1154 = vmatpush.msra.mxu0 0.0
  %1155 = vmatpush.msra.mxu0 0.0
  %1156 = vmatpush.msra.mxu0 0.0
  %1157 = vmatpush.msra.mxu0 %v1073
  %1158 = vmatpush.msra.mxu0 %v1072
  %1159 = vmatpush.msra.mxu0 %v1071
  %1160 = vmatpush.msra.mxu0 %v1070
  %1161 = vmatmul.f32.gmra.mxu0 %v1143
  %v1162 = vpop.f32.mrf.mxu0
  %v1163 = vadd.f32 0.0, %v1162
  %1164 = vdwg.mxu0
  %v1165 = vperm.slane %v1163, 0
  %v1166 = vmul.f32 %v1099, %v1165
  %v1167 = vld [vmem:[%s10] sm:$0x1]
  %v1169 = vsel %vm1074, %v1167, 0
  %1171 = vmatpush.msra.mxu0 0.0
  %1172 = vmatpush.msra.mxu0 0.0
  %1173 = vmatpush.msra.mxu0 0.0
  %1174 = vmatpush.msra.mxu0 0.0
  %1175 = vmatpush.msra.mxu0 0.0
  %1176 = vmatpush.msra.mxu0 0.0
  %1177 = vmatpush.msra.mxu0 0.0
  %1178 = vmatpush.msra.mxu0 0.0
  %1179 = vmatpush.msra.mxu0 0.0
  %1180 = vmatpush.msra.mxu0 0.0
  %1181 = vmatpush.msra.mxu0 0.0
  %1182 = vmatpush.msra.mxu0 0.0
  %1183 = vmatpush.msra.mxu0 %v1073
  %1184 = vmatpush.msra.mxu0 %v1072
  %1185 = vmatpush.msra.mxu0 %v1071
  %1186 = vmatpush.msra.mxu0 %v1070
  %1187 = vmatmul.f32.gmra.mxu0 %v1169
  %v1188 = vpop.f32.mrf.mxu0
  %v1189 = vadd.f32 0.0, %v1188
  %1190 = vdwg.mxu0
  %v1191 = vperm.slane %v1189, 0
  %v1192 = vadd.f32 %v1166, %v1191
  %vm1193 = vcmp.ge.f32.partialorder %v1192, 0.0
  %v1194 = vmul.f32 %v1192, 0.2
  %v1195 = vsel %vm1193, %v1192, %v1194
  %v1196 = vld [vmem:[%s11] sm:$0xff]
  %v1197 = vld [vmem:[%s11 + $0x8] sm:$0xff]
  %v1198 = vld [vmem:[%s11 + $0x10] sm:$0xff]
  %v1199 = vld [vmem:[%s11 + $0x18] sm:$0xff]
  %v1200 = vld [vmem:[%s11 + $0x20] sm:$0xff]
  %v1201 = vld [vmem:[%s11 + $0x28] sm:$0xff]
  %v1202 = vld [vmem:[%s11 + $0x30] sm:$0xff]
  %v1203 = vld [vmem:[%s11 + $0x38] sm:$0xff]
  %v1204 = vld [vmem:[%s11 + $0x40] sm:$0xff]
  %v1205 = vld [vmem:[%s11 + $0x48] sm:$0xff]
  %v1206 = vld [vmem:[%s11 + $0x50] sm:$0xff]
  %v1207 = vld [vmem:[%s11 + $0x58] sm:$0xff]
  %v1208 = vld [vmem:[%s11 + $0x60] sm:$0xff]
  %v1209 = vld [vmem:[%s11 + $0x68] sm:$0xff]
  %v1210 = vld [vmem:[%s11 + $0x70] sm:$0xff]
  %v1211 = vld [vmem:[%s11 + $0x78] sm:$0xff]
  %v1212 = vld [vmem:[#allocation2] sm:$0x1]
  %v1214 = vperm.slane %v1212, 0
  %1216 = vmatpush.msra.mxu0 %v1211
  %1217 = vmatpush.msra.mxu0 %v1210
  %1218 = vmatpush.msra.mxu0 %v1209
  %1219 = vmatpush.msra.mxu0 %v1208
  %1220 = vmatpush.msra.mxu0 %v1207
  %1221 = vmatpush.msra.mxu0 %v1206
  %1222 = vmatpush.msra.mxu0 %v1205
  %1223 = vmatpush.msra.mxu0 %v1204
  %1224 = vmatpush.msra.mxu0 %v1203
  %1225 = vmatpush.msra.mxu0 %v1202
  %1226 = vmatpush.msra.mxu0 %v1201
  %1227 = vmatpush.msra.mxu0 %v1200
  %1228 = vmatpush.msra.mxu0 %v1199
  %1229 = vmatpush.msra.mxu0 %v1198
  %1230 = vmatpush.msra.mxu0 %v1197
  %1231 = vmatpush.msra.mxu0 %v1196
  %1232 = vmatmul.f32.gmra.mxu0 %v1195
  %v1233 = vpop.f32.mrf.mxu0
  %v1234 = vadd.f32 %v1214, %v1233
  %1235 = vdwg.mxu0
  %v1236 = vxor.u32 %v1234, 2147483648
  %v1237 = vmul.f32 %v1236, 1.442695
  %v1238 = vpow.pop %v1237
  %v1239 = vadd.f32 %v1238, 1.0
  %v1240 = vrcp.pop %v1239
  %v1241 = vmul.f32 %v1239, %v1240
  %v1242 = vsub.f32 1.0, %v1241
  %v1243 = vmul.f32 %v1240, %v1242
  %v1244 = vadd.f32 %v1240, %v1243
  %vm1245 = vweird.f32 %v1239
  %vm1246 = vweird.f32 %v1240
  %vm1247 = vmor %vm1245, %vm1246
  %v1248 = vsel %vm1247, %v1240, %v1244
  %v1249 = vand.u32 2147483647, %v1239
  %vm1250 = vcmp.eq.f32.partialorder %v1249, 8.507059e+37
  %v1251 = vand.u32 %v1239, 2147483648
  %v1252 = vor.u32 1.1754944e-38, %v1251
  %v1253 = vsel %vm1250, %v1252, %v1248
  %v1254 = vmul.f32 1.0, %v1253
  %vm1255 = vcmask 1024
  %1256 = vst.msk [vmem:[%s13] sm:$0x3] %vm1255, %v1254
  // Predicated region
  $region54: #{discriminator_forward.5} parent=0 // pred_check
    _
  $region55: #{discriminator_forward.5} parent=0 // pred_check_branch
    %1258 = sbr.rel (0) target = $region57
  $region56: #{discriminator_forward.5} parent=0 // pred_region
    _
  $region57: #{discriminator_forward.5} parent=0 // pred_fallthru
    _
  // Predicated region
  $region58: #{discriminator_forward.5} parent=0 // pred_check
    _
  $region59: #{discriminator_forward.5} parent=0 // pred_check_branch
    %1260 = sbr.rel (0) target = $region61
  $region60: #{discriminator_forward.5} parent=0 // pred_region
    _
  $region61: #{discriminator_forward.5} parent=0 // pred_fallthru
    _

</llo_original>
